<compile_context>
chip_gen: v7x
topology: tpu7x:2x2x1
jax: 0.10.0
libtpu: 0.0.40
codegen_flags: <defaults>
</compile_context>

<pallas_src>
import jax
import jax.numpy as jnp
from jax import lax
from jax.experimental import pallas as pl
from jax.experimental.pallas import tpu as pltpu


# Hidden-layer widths of the PyTorch module.
_DIMS = (100, 40, 10, 1)
# Sublane-aligned (multiple-of-8) row offsets of each bias inside the packed
# (168, 1) bias tensor.
_BIAS_OFF = (0, 104, 144, 160)
_BIAS_PACK_ROWS = 168


def _round_up(v, m):
    return ((v + m - 1) // m) * m


def _vmem_bytes(tile, n_features):
    """Conservative VMEM estimate (f32, tile-padded, double-buffered I/O)."""
    f_pad = _round_up(n_features, 128)
    t_pad = _round_up(tile, 128)
    x_tile = tile * f_pad * 4                                   # input tile
    o_tile = 8 * t_pad * 4                                      # (1,tile) output slab
    inter = (_round_up(100, 8) + _round_up(40, 8) + _round_up(10, 8)) * t_pad * 4
    w_res = (_round_up(100, 8) * f_pad                          # w1 (100, F)
             + _round_up(40, 8) * 128                           # w2 (40, 100)
             + _round_up(10, 8) * 128                           # w3 (10, 40)
             + 8 * 128                                          # w4 (1, 10)
             + _BIAS_PACK_ROWS * 128) * 4                       # bias pack
    return 2 * (x_tile + o_tile + w_res) + 2 * inter


def _pack_biases(b1, b2, b3, b4):
    """Pack the four biases as a single (168, 1) column at 8-aligned offsets."""
    pack = jnp.zeros((_BIAS_PACK_ROWS, 1), jnp.float32)
    for off, b in zip(_BIAS_OFF, (b1, b2, b3, b4)):
        b = b.reshape(-1).astype(jnp.float32)
        pack = pack.at[off:off + b.shape[0], 0].set(b)
    return pack


def _make_mlp_kernel(compute_dtype):
    d1, d2, d3, d4 = _DIMS
    o1, o2, o3, o4 = _BIAS_OFF

    def mlp_kernel(x_ref, w1_ref, w2_ref, w3_ref, w4_ref, b_ref, o_ref):
        x = x_ref[...]                              # (tile, F), batch on sublanes
        # Static, sublane-aligned slices of the packed bias column.
        b1 = b_ref[o1:o1 + d1, :]                   # (100, 1)
        b2 = b_ref[o2:o2 + d2, :]                   # (40, 1)
        b3 = b_ref[o3:o3 + d3, :]                   # (10, 1)
        b4 = b_ref[o4:o4 + d4, :]                   # (1, 1)

        # Layer 1: (100, F) @ (tile, F)^T -> (100, tile). Contract the last
        # dims of both operands (attention-style A @ B.T, MXU-friendly).
        h = lax.dot_general(w1_ref[...], x, (((1,), (1,)), ((), ())),
                            preferred_element_type=jnp.float32) + b1
        h = jnp.maximum(h, 0.0)
        # Layers 2-4: standard W @ h with the batch tile on the lane/N axis.
        h = jnp.dot(w2_ref[...], h.astype(compute_dtype),
                    preferred_element_type=jnp.float32) + b2
        h = jnp.maximum(h, 0.0)
        h = jnp.dot(w3_ref[...], h.astype(compute_dtype),
                    preferred_element_type=jnp.float32) + b3
        h = jnp.maximum(h, 0.0)
        y = jnp.dot(w4_ref[...], h.astype(compute_dtype),
                    preferred_element_type=jnp.float32) + b4     # (1, tile)
        o_ref[...] = y.astype(o_ref.dtype)          # lane-dense, unmasked store

    return mlp_kernel


def _choose_tile(batch, n_features, target_steps, max_tile, vmem_budget_bytes):
    """Tile = multiple of 128 (lane-dense output), few grid steps, VMEM-safe."""
    tile = _round_up(max(1, pl.cdiv(batch, max(1, target_steps))), 128)
    tile = max(128, min(tile, _round_up(max_tile, 128)))
    while tile > 128 and _vmem_bytes(tile, n_features) > vmem_budget_bytes:
        tile = max(128, _round_up(tile // 2, 128))
    steps = pl.cdiv(batch, tile)
    # Prefer an even step count when >1 step (both v7x TensorCores stay busy).
    if steps > 1 and steps % 2 == 1:
        alt = max(128, _round_up(pl.cdiv(batch, steps + 1), 128))
        if alt < tile and pl.cdiv(batch, alt) % 2 == 0:
            tile = alt
            steps = pl.cdiv(batch, alt)
    return tile, steps


def mlp_forward(x, params, *, target_steps=2, max_batch_tile=4096,
                vmem_budget_bytes=24 * 2**20, use_bf16=False):
    """x: (B, n_features) f32. params: PyTorch-layout w1..w4 (out,in), b1..b4."""
    B, F = x.shape
    compute_dtype = jnp.bfloat16 if use_bf16 else jnp.float32

    w1 = params["w1"].astype(compute_dtype)   # (100, F)
    w2 = params["w2"].astype(compute_dtype)   # (40, 100)
    w3 = params["w3"].astype(compute_dtype)   # (10, 40)
    w4 = params["w4"].astype(compute_dtype)   # (1, 10)
    b_pack = _pack_biases(params["b1"], params["b2"], params["b3"], params["b4"])
    xk = x.astype(compute_dtype)

    tile, steps = _choose_tile(B, F, target_steps, max_batch_tile,
                               vmem_budget_bytes)
    out_cols = steps * tile                    # >= B; tail columns are garbage

    vmem_limit = int(min(48 * 2**20, max(32 * 2**20, 2 * _vmem_bytes(tile, F))))

    resident = lambda shape: pl.BlockSpec(shape, lambda i: (0, 0))

    out = pl.pallas_call(
        _make_mlp_kernel(compute_dtype),
        out_shape=jax.ShapeDtypeStruct((1, out_cols), jnp.float32),
        grid_spec=pltpu.PrefetchScalarGridSpec(
            num_scalar_prefetch=0,
            grid=(steps,),
            in_specs=[
                pl.BlockSpec((tile, F), lambda i: (i, 0)),  # x tile (pipelined)
                resident(w1.shape),                         # weights stay resident
                resident(w2.shape),
                resident(w3.shape),
                resident(w4.shape),
                resident(b_pack.shape),                     # packed biases
            ],
            out_specs=pl.BlockSpec((1, tile), lambda i: (0, i)),
        ),
        compiler_params=pltpu.CompilerParams(
            dimension_semantics=("parallel",),   # megacore sharding on v7x
            vmem_limit_bytes=vmem_limit,
        ),
    )(xk, w1, w2, w3, w4, b_pack)

    # (1, steps*tile) -> (steps*tile, 1) is a contiguous reshape; drop the
    # garbage tail rows produced by the partial last block.
    return out.reshape(-1, 1)[:B]


def init_params(key, n_features):
    """Deterministic synthetic init (uniform, like PyTorch's default bound).

    Weights are stored in the PyTorch layout (out_features, in_features).
    """
    dims = [n_features, *_DIMS]
    params = {}
    keys = jax.random.split(key, 8)
    for li, (d_in, d_out) in enumerate(zip(dims[:-1], dims[1:]), start=1):
        bound = float(1.0 / (d_in ** 0.5))
        params[f"w{li}"] = jax.random.uniform(
            keys[2 * (li - 1)], (d_out, d_in), jnp.float32, -bound, bound)
        params[f"b{li}"] = jax.random.uniform(
            keys[2 * (li - 1) + 1], (d_out,), jnp.float32, -bound, bound)
    return params


def mlp_reference(x, p):
    with jax.default_matmul_precision("float32"):
        h = jnp.maximum(x @ p["w1"].T + p["b1"], 0.0)
        h = jnp.maximum(h @ p["w2"].T + p["b2"], 0.0)
        h = jnp.maximum(h @ p["w3"].T + p["b3"], 0.0)
        return h @ p["w4"].T + p["b4"]


if __name__ == "__main__":
    key = jax.random.PRNGKey(0)
    k_x, k_x2, k_p = jax.random.split(key, 3)

    n_features = 32
    params = init_params(k_p, n_features)

    # Main case: B=1024 -> tile 512, an even 2-step grid (both TCs on v7x,
    # negligible extra overhead on single-TC v5e/v6e).
    batch = 1024
    x = jax.random.normal(k_x, (batch, n_features), dtype=jnp.float32)
    y = jax.block_until_ready(mlp_forward(x, params))
    y_ref = mlp_reference(x, params)
    assert y.shape == (batch, 1)
    assert jnp.allclose(y, y_ref, atol=1e-4, rtol=1e-4)

    # Ragged batch: exercises the partial-last-block path (no jnp.pad copy).
    batch2 = 200
    x2 = jax.random.normal(k_x2, (batch2, n_features), dtype=jnp.float32)
    y2 = jax.block_until_ready(mlp_forward(x2, params))
    assert y2.shape == (batch2, 1)
    assert jnp.allclose(y2, mlp_reference(x2, params), atol=1e-4, rtol=1e-4)

    # Opt-in bf16 input/weight path (f32 accumulation) -- looser tolerance.
    y3 = jax.block_until_ready(mlp_forward(x, params, use_bf16=True))
    assert y3.shape == (batch, 1)
    assert jnp.allclose(y3, y_ref, atol=1e-1, rtol=5e-2)

    print("KERNEL_OK")
</pallas_src>

<mosaic_0001>
module attributes {stable_mosaic.version = 11 : i64} {
  func.func @mlp_kernel(%arg0: i32, %arg1: memref<512x32xf32, #tpu.memory_space<vmem>>, %arg2: memref<100x32xf32, #tpu.memory_space<vmem>>, %arg3: memref<40x100xf32, #tpu.memory_space<vmem>>, %arg4: memref<10x40xf32, #tpu.memory_space<vmem>>, %arg5: memref<1x10xf32, #tpu.memory_space<vmem>>, %arg6: memref<168x1xf32, #tpu.memory_space<vmem>>, %arg7: memref<1x512xf32, #tpu.memory_space<vmem>>) attributes {dimension_semantics = [#tpu.dimension_semantics<parallel>], iteration_bounds = array<i64: 2>, scalar_prefetch = 0 : i64, scratch_operands = 0 : i64, tpu.core_type = #tpu.core_type<tc>, window_params = [{transform_indices = @transform_0, window_bounds = array<i64: 512, 32>}, {pipeline_mode = #tpu.pipeline_mode<synchronous>, transform_indices = @transform_1, window_bounds = array<i64: 100, 32>}, {pipeline_mode = #tpu.pipeline_mode<synchronous>, transform_indices = @transform_2, window_bounds = array<i64: 40, 100>}, {pipeline_mode = #tpu.pipeline_mode<synchronous>, transform_indices = @transform_3, window_bounds = array<i64: 10, 40>}, {pipeline_mode = #tpu.pipeline_mode<synchronous>, transform_indices = @transform_4, window_bounds = array<i64: 1, 10>}, {pipeline_mode = #tpu.pipeline_mode<synchronous>, transform_indices = @transform_5, window_bounds = array<i64: 168, 1>}, {transform_indices = @transform_6, window_bounds = array<i64: 1, 512>}]} {
    %c0 = arith.constant 0 : index
    %c0_0 = arith.constant 0 : index
    %0 = vector.load %arg1[%c0, %c0_0] : memref<512x32xf32, #tpu.memory_space<vmem>>, vector<512x32xf32>
    %c0_1 = arith.constant 0 : index
    %c0_2 = arith.constant 0 : index
    %1 = vector.load %arg6[%c0_1, %c0_2] : memref<168x1xf32, #tpu.memory_space<vmem>>, vector<100x1xf32>
    %c104 = arith.constant 104 : index
    %c0_3 = arith.constant 0 : index
    %2 = vector.load %arg6[%c104, %c0_3] : memref<168x1xf32, #tpu.memory_space<vmem>>, vector<40x1xf32>
    %c144 = arith.constant 144 : index
    %c0_4 = arith.constant 0 : index
    %3 = vector.load %arg6[%c144, %c0_4] : memref<168x1xf32, #tpu.memory_space<vmem>>, vector<10x1xf32>
    %c160 = arith.constant 160 : index
    %c0_5 = arith.constant 0 : index
    %4 = vector.load %arg6[%c160, %c0_5] : memref<168x1xf32, #tpu.memory_space<vmem>>, vector<1x1xf32>
    %c0_6 = arith.constant 0 : index
    %c0_7 = arith.constant 0 : index
    %5 = vector.load %arg2[%c0_6, %c0_7] : memref<100x32xf32, #tpu.memory_space<vmem>>, vector<100x32xf32>
    %cst = arith.constant dense<0.000000e+00> : vector<100x512xf32>
    %6 = tpu.matmul %5, %0, %cst {dimension_numbers = #tpu.dot_dimension_numbers<[1], [1], [0], [0], [0, 0, 1, 0], [], []>} : vector<100x32xf32>, vector<512x32xf32>, vector<100x512xf32> -> vector<100x512xf32>
    %7 = vector.broadcast %1 : vector<100x1xf32> to vector<100x512xf32>
    %8 = arith.addf %6, %7 : vector<100x512xf32>
    %cst_8 = arith.constant 0.000000e+00 : f32
    %9 = vector.broadcast %cst_8 : f32 to vector<100x512xf32>
    %10 = arith.maximumf %8, %9 : vector<100x512xf32>
    %c0_9 = arith.constant 0 : index
    %c0_10 = arith.constant 0 : index
    %11 = vector.load %arg3[%c0_9, %c0_10] : memref<40x100xf32, #tpu.memory_space<vmem>>, vector<40x100xf32>
    %cst_11 = arith.constant dense<0.000000e+00> : vector<40x512xf32>
    %12 = tpu.matmul %11, %10, %cst_11 {dimension_numbers = #tpu.dot_dimension_numbers<[1], [0], [0], [1], [0, 0, 1, 1], [], []>} : vector<40x100xf32>, vector<100x512xf32>, vector<40x512xf32> -> vector<40x512xf32>
    %13 = vector.broadcast %2 : vector<40x1xf32> to vector<40x512xf32>
    %14 = arith.addf %12, %13 : vector<40x512xf32>
    %cst_12 = arith.constant 0.000000e+00 : f32
    %15 = vector.broadcast %cst_12 : f32 to vector<40x512xf32>
    %16 = arith.maximumf %14, %15 : vector<40x512xf32>
    %c0_13 = arith.constant 0 : index
    %c0_14 = arith.constant 0 : index
    %17 = vector.load %arg4[%c0_13, %c0_14] : memref<10x40xf32, #tpu.memory_space<vmem>>, vector<10x40xf32>
    %cst_15 = arith.constant dense<0.000000e+00> : vector<10x512xf32>
    %18 = tpu.matmul %17, %16, %cst_15 {dimension_numbers = #tpu.dot_dimension_numbers<[1], [0], [0], [1], [0, 0, 1, 1], [], []>} : vector<10x40xf32>, vector<40x512xf32>, vector<10x512xf32> -> vector<10x512xf32>
    %19 = vector.broadcast %3 : vector<10x1xf32> to vector<10x512xf32>
    %20 = arith.addf %18, %19 : vector<10x512xf32>
    %cst_16 = arith.constant 0.000000e+00 : f32
    %21 = vector.broadcast %cst_16 : f32 to vector<10x512xf32>
    %22 = arith.maximumf %20, %21 : vector<10x512xf32>
    %c0_17 = arith.constant 0 : index
    %c0_18 = arith.constant 0 : index
    %23 = vector.load %arg5[%c0_17, %c0_18] : memref<1x10xf32, #tpu.memory_space<vmem>>, vector<1x10xf32>
    %cst_19 = arith.constant dense<0.000000e+00> : vector<1x512xf32>
    %24 = tpu.matmul %23, %22, %cst_19 {dimension_numbers = #tpu.dot_dimension_numbers<[1], [0], [0], [1], [0, 0, 1, 1], [], []>} : vector<1x10xf32>, vector<10x512xf32>, vector<1x512xf32> -> vector<1x512xf32>
    %25 = vector.broadcast %4 : vector<1x1xf32> to vector<1x512xf32>
    %26 = arith.addf %24, %25 : vector<1x512xf32>
    %c0_20 = arith.constant 0 : index
    %c0_21 = arith.constant 0 : index
    %27 = vector.load %arg7[%c0_20, %c0_21] : memref<1x512xf32, #tpu.memory_space<vmem>>, vector<1x512xf32>
    tpu.vector_store %arg7[%c0_20, %c0_21], %26 {strides = array<i32>} : memref<1x512xf32, #tpu.memory_space<vmem>>, vector<1x512xf32>,
    return
  }
  func.func @transform_0(%arg0: i32) -> (i32, i32) {
    %c0_i32 = arith.constant 0 : i32
    %c0_i32_0 = arith.constant 0 : i32
    return %arg0, %c0_i32 : i32, i32
  }
  func.func @transform_1(%arg0: i32) -> (i32, i32) {
    %c0_i32 = arith.constant 0 : i32
    %c0_i32_0 = arith.constant 0 : i32
    %c0_i32_1 = arith.constant 0 : i32
    return %c0_i32, %c0_i32_0 : i32, i32
  }
  func.func @transform_2(%arg0: i32) -> (i32, i32) {
    %c0_i32 = arith.constant 0 : i32
    %c0_i32_0 = arith.constant 0 : i32
    %c0_i32_1 = arith.constant 0 : i32
    return %c0_i32, %c0_i32_0 : i32, i32
  }
  func.func @transform_3(%arg0: i32) -> (i32, i32) {
    %c0_i32 = arith.constant 0 : i32
    %c0_i32_0 = arith.constant 0 : i32
    %c0_i32_1 = arith.constant 0 : i32
    return %c0_i32, %c0_i32_0 : i32, i32
  }
  func.func @transform_4(%arg0: i32) -> (i32, i32) {
    %c0_i32 = arith.constant 0 : i32
    %c0_i32_0 = arith.constant 0 : i32
    %c0_i32_1 = arith.constant 0 : i32
    return %c0_i32, %c0_i32_0 : i32, i32
  }
  func.func @transform_5(%arg0: i32) -> (i32, i32) {
    %c0_i32 = arith.constant 0 : i32
    %c0_i32_0 = arith.constant 0 : i32
    %c0_i32_1 = arith.constant 0 : i32
    return %c0_i32, %c0_i32_0 : i32, i32
  }
  func.func @transform_6(%arg0: i32) -> (i32, i32) {
    %c0_i32 = arith.constant 0 : i32
    %c0_i32_0 = arith.constant 0 : i32
    return %c0_i32, %arg0 : i32, i32
  }
}

</mosaic_0001>

<llo_original>
// kernel: tpu_custom_call.1
$region0: #{tpu_custom_call.1}
  #allocation0 [shape = 'u32[]', space=smem, size = 0x4, offset = 0x4, fixed_abs, tag = 'smem constant byte address 0x4 - core index']
  #allocation1 [shape = 'u32[144,128]{1,0:T(1,128)}', space=vmem, size = 0x12000, scoped, tag = 'internal scratch']
  %s0 = inlined_call_operand.vmem [shape: f32[1024,32], index: 0, kind: input, shape index: {}]
  %s1 = inlined_call_operand.vmem [shape: f32[100,32], index: 1, kind: input, shape index: {}]
  %s2 = inlined_call_operand.vmem [shape: f32[40,100], index: 2, kind: input, shape index: {}]
  %s3 = inlined_call_operand.vmem [shape: f32[10,40], index: 3, kind: input, shape index: {}]
  %s4 = inlined_call_operand.vmem [shape: f32[1,10], index: 4, kind: input, shape index: {}]
  %s5 = inlined_call_operand.vmem [shape: f32[168,1], index: 5, kind: input, shape index: {}]
  %s6 = inlined_call_operand.hbm [shape: f32[1,1024], index: 6, kind: output, shape index: {}]
  %s7 = sld [smem:[#allocation0]]
  $region57: #{tpu_custom_call.1} parent=0
    _
  %s9 = ssub.s32 1, %s7
  %s10 = scalar_select 0, %s9, %s7
  $region1: #{tpu_custom_call.1} parent=0
    #allocation2 [shape = 'u8[4096]{0}', space=vmem, size = 0x1000, scoped, tag = 'output window, operand 0']
    #allocation3 [shape = 's32[2]{0}', space=sflag, size = 0x8, scoped, tag = 'scoped memory for tpu_custom_call.1']
    %11 = vsyncpa [#allocation3], 0
    %s12 = scalar_lea.sflag [#allocation3], 1
    %13 = vsyncpa %s12, 0
    loop: start=0, step=1, limit=4
    $region2: #{tpu_custom_call.1} parent=1 // loop_pre_header
      _
    $region3: #{tpu_custom_call.1} parent=1 // loop_header
      %s15 = sphi 0, %s19
      %p16 = scmp.ge.s32.totalorder %s15, 4
      %s25 = sphi 0, %s27
      %s28 = sphi 0, %s25
      %s29 = sphi 0, %s28
      %s45 = sphi 0, %s29
      %s49 = sphi 0, %s49
      %s51 = sphi 0, %s49
      %s52 = sphi 0, %s51
      %s66 = sphi 0, %s52
      %s70 = sphi 0, %s70
      %s72 = sphi 0, %s70
      %s73 = sphi 0, %s72
      %s87 = sphi 0, %s73
      %s91 = sphi 0, %s91
      %s93 = sphi 0, %s91
      %s94 = sphi 0, %s93
      %s108 = sphi 0, %s94
      %s112 = sphi 0, %s112
      %s114 = sphi 0, %s112
      %s115 = sphi 0, %s114
      %s129 = sphi 0, %s115
      %s133 = sphi 0, %s133
      %s135 = sphi 0, %s133
      %s136 = sphi 0, %s135
      %s150 = sphi 0, %s136
      %s156 = sphi 0, %s158
      %s159 = sphi 0, %s156
      %s160 = sphi 0, %s159
      %s176 = sphi 0, %s160
    $region4: #{tpu_custom_call.1} parent=1 // loop_header_branch
      %18 = sbr.rel (%p16) target = $region8
    $region5: #{tpu_custom_call.1} parent=1 // loop_body
      %s20 = ssub.s32 %s15, 1
      %s21 = ssub.s32 %s15, 2
      %s22 = sadd.s32 %s15, 1
      %s23 = ssub.s32 %s15, %s22
      %p24 = scmp.eq.s32.totalorder %s23, 0
      %s26 = sadd.s32 %s25, 1
      %s27 = scalar_select %p24, %s25, %s26
      %p30 = pneg %p24
      %p31 = scmp.eq.s32.totalorder %s15, 1
      %p32 = por %p30, %p31
      %p33 = scmp.ne.s32.totalorder %s25, %s28
      %p34 = scmp.eq.s32.totalorder %s15, 0
      %p35 = por %p33, %p34
      %p36 = scmp.ne.s32.totalorder %s25, %s28
      %p37 = scmp.eq.s32.totalorder %s20, 1
      %p38 = por %p36, %p37
      %p39 = scmp.ne.s32.totalorder %s28, %s29
      %p40 = scmp.eq.s32.totalorder %s20, 0
      %p41 = por %p39, %p40
      %p42 = scmp.ne.s32.totalorder %s28, %s29
      %p43 = scmp.eq.s32.totalorder %s21, 1
      %p44 = por %p42, %p43
      %p46 = scmp.ne.s32.totalorder %s29, %s45
      %p47 = scmp.eq.s32.totalorder %s21, 0
      %p48 = por %p46, %p47
      %s50 = sadd.s32 %s49, 1
      %p53 = scmp.eq.s32.totalorder %s15, 1
      %p54 = scmp.ne.s32.totalorder %s49, %s51
      %p55 = scmp.eq.s32.totalorder %s15, 0
      %p56 = por %p54, %p55
      %p57 = scmp.ne.s32.totalorder %s49, %s51
      %p58 = scmp.eq.s32.totalorder %s20, 1
      %p59 = por %p57, %p58
      %p60 = scmp.ne.s32.totalorder %s51, %s52
      %p61 = scmp.eq.s32.totalorder %s20, 0
      %p62 = por %p60, %p61
      %p63 = scmp.ne.s32.totalorder %s51, %s52
      %p64 = scmp.eq.s32.totalorder %s21, 1
      %p65 = por %p63, %p64
      %p67 = scmp.ne.s32.totalorder %s52, %s66
      %p68 = scmp.eq.s32.totalorder %s21, 0
      %p69 = por %p67, %p68
      %s71 = sadd.s32 %s70, 1
      %p74 = scmp.eq.s32.totalorder %s15, 1
      %p75 = scmp.ne.s32.totalorder %s70, %s72
      %p76 = scmp.eq.s32.totalorder %s15, 0
      %p77 = por %p75, %p76
      %p78 = scmp.ne.s32.totalorder %s70, %s72
      %p79 = scmp.eq.s32.totalorder %s20, 1
      %p80 = por %p78, %p79
      %p81 = scmp.ne.s32.totalorder %s72, %s73
      %p82 = scmp.eq.s32.totalorder %s20, 0
      %p83 = por %p81, %p82
      %p84 = scmp.ne.s32.totalorder %s72, %s73
      %p85 = scmp.eq.s32.totalorder %s21, 1
      %p86 = por %p84, %p85
      %p88 = scmp.ne.s32.totalorder %s73, %s87
      %p89 = scmp.eq.s32.totalorder %s21, 0
      %p90 = por %p88, %p89
      %s92 = sadd.s32 %s91, 1
      %p95 = scmp.eq.s32.totalorder %s15, 1
      %p96 = scmp.ne.s32.totalorder %s91, %s93
      %p97 = scmp.eq.s32.totalorder %s15, 0
      %p98 = por %p96, %p97
      %p99 = scmp.ne.s32.totalorder %s91, %s93
      %p100 = scmp.eq.s32.totalorder %s20, 1
      %p101 = por %p99, %p100
      %p102 = scmp.ne.s32.totalorder %s93, %s94
      %p103 = scmp.eq.s32.totalorder %s20, 0
      %p104 = por %p102, %p103
      %p105 = scmp.ne.s32.totalorder %s93, %s94
      %p106 = scmp.eq.s32.totalorder %s21, 1
      %p107 = por %p105, %p106
      %p109 = scmp.ne.s32.totalorder %s94, %s108
      %p110 = scmp.eq.s32.totalorder %s21, 0
      %p111 = por %p109, %p110
      %s113 = sadd.s32 %s112, 1
      %p116 = scmp.eq.s32.totalorder %s15, 1
      %p117 = scmp.ne.s32.totalorder %s112, %s114
      %p118 = scmp.eq.s32.totalorder %s15, 0
      %p119 = por %p117, %p118
      %p120 = scmp.ne.s32.totalorder %s112, %s114
      %p121 = scmp.eq.s32.totalorder %s20, 1
      %p122 = por %p120, %p121
      %p123 = scmp.ne.s32.totalorder %s114, %s115
      %p124 = scmp.eq.s32.totalorder %s20, 0
      %p125 = por %p123, %p124
      %p126 = scmp.ne.s32.totalorder %s114, %s115
      %p127 = scmp.eq.s32.totalorder %s21, 1
      %p128 = por %p126, %p127
      %p130 = scmp.ne.s32.totalorder %s115, %s129
      %p131 = scmp.eq.s32.totalorder %s21, 0
      %p132 = por %p130, %p131
      %s134 = sadd.s32 %s133, 1
      %p137 = scmp.eq.s32.totalorder %s15, 1
      %p138 = scmp.ne.s32.totalorder %s133, %s135
      %p139 = scmp.eq.s32.totalorder %s15, 0
      %p140 = por %p138, %p139
      %p141 = scmp.ne.s32.totalorder %s133, %s135
      %p142 = scmp.eq.s32.totalorder %s20, 1
      %p143 = por %p141, %p142
      %p144 = scmp.ne.s32.totalorder %s135, %s136
      %p145 = scmp.eq.s32.totalorder %s20, 0
      %p146 = por %p144, %p145
      %p147 = scmp.ne.s32.totalorder %s135, %s136
      %p148 = scmp.eq.s32.totalorder %s21, 1
      %p149 = por %p147, %p148
      %p151 = scmp.ne.s32.totalorder %s136, %s150
      %p152 = scmp.eq.s32.totalorder %s21, 0
      %p153 = por %p151, %p152
      %s154 = ssub.s32 %s15, %s22
      %p155 = scmp.eq.s32.totalorder %s154, 0
      %s157 = sadd.s32 %s156, 1
      %s158 = scalar_select %p155, %s156, %s157
      %p161 = pneg %p155
      %p162 = scmp.eq.s32.totalorder %s15, 1
      %p163 = por %p161, %p162
      %p164 = scmp.ne.s32.totalorder %s156, %s159
      %p165 = scmp.eq.s32.totalorder %s15, 0
      %p166 = por %p164, %p165
      %p167 = scmp.ne.s32.totalorder %s156, %s159
      %p168 = scmp.eq.s32.totalorder %s20, 1
      %p169 = por %p167, %p168
      %p170 = scmp.ne.s32.totalorder %s159, %s160
      %p171 = scmp.eq.s32.totalorder %s20, 0
      %p172 = por %p170, %p171
      %p173 = scmp.ne.s32.totalorder %s159, %s160
      %p174 = scmp.eq.s32.totalorder %s21, 1
      %p175 = por %p173, %p174
      %p177 = scmp.ne.s32.totalorder %s160, %s176
      %p178 = scmp.eq.s32.totalorder %s21, 0
      %p179 = por %p177, %p178
      %p180 = scmp.le.s32.totalorder 1, %s15
      %p181 = scmp.lt.s32.totalorder %s15, 3
      %p182 = pnand %p180, %p181
      %p183 = pneg %p182
      // Predicated region
      $region9: #{tpu_custom_call.1} parent=5 // pred_check
        _
      $region10: #{tpu_custom_call.1} parent=5 // pred_check_branch
        %185 = sbr.rel (%p182) target = $region12
      $region11: #{tpu_custom_call.1} parent=5 // pred_region
        %s186 = ssub.s32 %s15, 1
        // Predicated region
        $region13: #{tpu_custom_call.1} parent=11 // pred_check
          %p187 = pneg %p62
        $region14: #{tpu_custom_call.1} parent=11 // pred_check_branch
          %189 = sbr.rel (%p187) target = $region16
        $region15: #{tpu_custom_call.1} parent=11 // pred_region
          _
        $region16: #{tpu_custom_call.1} parent=11 // pred_fallthru
          _
        // Predicated region
        $region17: #{tpu_custom_call.1} parent=11 // pred_check
          %p190 = pneg %p83
        $region18: #{tpu_custom_call.1} parent=11 // pred_check_branch
          %192 = sbr.rel (%p190) target = $region20
        $region19: #{tpu_custom_call.1} parent=11 // pred_region
          _
        $region20: #{tpu_custom_call.1} parent=11 // pred_fallthru
          _
        // Predicated region
        $region21: #{tpu_custom_call.1} parent=11 // pred_check
          %p193 = pneg %p104
        $region22: #{tpu_custom_call.1} parent=11 // pred_check_branch
          %195 = sbr.rel (%p193) target = $region24
        $region23: #{tpu_custom_call.1} parent=11 // pred_region
          _
        $region24: #{tpu_custom_call.1} parent=11 // pred_fallthru
          _
        // Predicated region
        $region25: #{tpu_custom_call.1} parent=11 // pred_check
          %p196 = pneg %p125
        $region26: #{tpu_custom_call.1} parent=11 // pred_check_branch
          %198 = sbr.rel (%p196) target = $region28
        $region27: #{tpu_custom_call.1} parent=11 // pred_region
          _
        $region28: #{tpu_custom_call.1} parent=11 // pred_fallthru
          _
        // Predicated region
        $region29: #{tpu_custom_call.1} parent=11 // pred_check
          %p199 = pneg %p146
        $region30: #{tpu_custom_call.1} parent=11 // pred_check_branch
          %201 = sbr.rel (%p199) target = $region32
        $region31: #{tpu_custom_call.1} parent=11 // pred_region
          _
        $region32: #{tpu_custom_call.1} parent=11 // pred_fallthru
          _
      $region12: #{tpu_custom_call.1} parent=5 // pred_fallthru
        _
      %p202 = scmp.lt.s32.totalorder %s15, 2
      // Predicated region
      $region33: #{tpu_custom_call.1} parent=5 // pred_check
        %p203 = pneg %p202
      $region34: #{tpu_custom_call.1} parent=5 // pred_check_branch
        %205 = sbr.rel (%p203) target = $region36
      $region35: #{tpu_custom_call.1} parent=5 // pred_region
        // Predicated region
        $region37: #{tpu_custom_call.1} parent=35 // pred_check
          %p206 = pneg %p35
        $region38: #{tpu_custom_call.1} parent=35 // pred_check_branch
          %208 = sbr.rel (%p206) target = $region40
        $region39: #{tpu_custom_call.1} parent=35 // pred_region
          %s209 = smul.u32 64, %s15
          %p210 = scmp.lt.s32.totalorder %s209, 127
          %s211 = scalar_select %p210, %s209, 127
          %s212 = smul.addr %s211, 8
          %s213 = scalar_lea.vmem %s0, %s212
          %s214 = smul.u32 64, %s15
        $region40: #{tpu_custom_call.1} parent=35 // pred_fallthru
          _
      $region36: #{tpu_custom_call.1} parent=5 // pred_fallthru
        _
      %p215 = scmp.le.s32.totalorder 1, %s15
      %p216 = scmp.lt.s32.totalorder %s15, 3
      %p217 = pnand %p215, %p216
      %p218 = pneg %p217
      // Predicated region
      $region41: #{tpu_custom_call.1} parent=5 // pred_check
        _
      $region42: #{tpu_custom_call.1} parent=5 // pred_check_branch
        %220 = sbr.rel (%p217) target = $region44
      $region43: #{tpu_custom_call.1} parent=5 // pred_region
        %s221 = ssub.s32 %s15, 1
        %s222 = smul.u32 64, %s20
        %p223 = scmp.lt.s32.totalorder %s222, 127
        %s224 = scalar_select %p223, %s222, 127
        %s225 = smul.addr %s224, 8
        %s226 = scalar_lea.vmem %s0, %s225
        %p227 = pneg %p41
        %p228 = pneg %p38
        %p229 = pneg %p62
        %p230 = pneg %p59
        %p231 = pneg %p83
        %p232 = pneg %p80
        %p233 = pneg %p104
        %p234 = pneg %p101
        %p235 = pneg %p125
        %p236 = pneg %p122
        %p237 = pneg %p146
        %p238 = pneg %p143
        %p239 = pneg %p172
        %p240 = pneg %p169
        %s241 = sand.u32 %s159, 1
        %s242 = scalar_lea.sflag [#allocation3], %s241
        %s243 = sand.u32 %s159, 1
        %s244 = smul.addr %s243, 4
        %s245 = scalar_lea.vmem [#allocation2], %s244
        %s246 = smul.u32 64, %s20
        %p247 = scmp.lt.s32.totalorder %s246, 127
        %s248 = scalar_select %p247, %s246, 127
        %s249 = smul.addr %s248, 8
        %s250 = scalar_lea.vmem %s0, %s249
        %s251 = smul.u32 64, %s20
        %s252 = smul.u32 4, %s20
        %v253 = vld [vmem:[%s250] sm:$0xff]
        %v254 = vld [vmem:[%s250 + $0x8] sm:$0xff]
        %v255 = vld [vmem:[%s250 + $0x10] sm:$0xff]
        %v256 = vld [vmem:[%s250 + $0x18] sm:$0xff]
        %v257 = vld [vmem:[%s250 + $0x20] sm:$0xff]
        %v258 = vld [vmem:[%s250 + $0x28] sm:$0xff]
        %v259 = vld [vmem:[%s250 + $0x30] sm:$0xff]
        %v260 = vld [vmem:[%s250 + $0x38] sm:$0xff]
        %v261 = vld [vmem:[%s250 + $0x40] sm:$0xff]
        %v262 = vld [vmem:[%s250 + $0x48] sm:$0xff]
        %v263 = vld [vmem:[%s250 + $0x50] sm:$0xff]
        %v264 = vld [vmem:[%s250 + $0x58] sm:$0xff]
        %v265 = vld [vmem:[%s250 + $0x60] sm:$0xff]
        %v266 = vld [vmem:[%s250 + $0x68] sm:$0xff]
        %v267 = vld [vmem:[%s250 + $0x70] sm:$0xff]
        %v268 = vld [vmem:[%s250 + $0x78] sm:$0xff]
        %v269 = vld [vmem:[%s250 + $0x80] sm:$0xff]
        %v270 = vld [vmem:[%s250 + $0x88] sm:$0xff]
        %v271 = vld [vmem:[%s250 + $0x90] sm:$0xff]
        %v272 = vld [vmem:[%s250 + $0x98] sm:$0xff]
        %v273 = vld [vmem:[%s250 + $0xa0] sm:$0xff]
        %v274 = vld [vmem:[%s250 + $0xa8] sm:$0xff]
        %v275 = vld [vmem:[%s250 + $0xb0] sm:$0xff]
        %v276 = vld [vmem:[%s250 + $0xb8] sm:$0xff]
        %v277 = vld [vmem:[%s250 + $0xc0] sm:$0xff]
        %v278 = vld [vmem:[%s250 + $0xc8] sm:$0xff]
        %v279 = vld [vmem:[%s250 + $0xd0] sm:$0xff]
        %v280 = vld [vmem:[%s250 + $0xd8] sm:$0xff]
        %v281 = vld [vmem:[%s250 + $0xe0] sm:$0xff]
        %v282 = vld [vmem:[%s250 + $0xe8] sm:$0xff]
        %v283 = vld [vmem:[%s250 + $0xf0] sm:$0xff]
        %v284 = vld [vmem:[%s250 + $0xf8] sm:$0xff]
        %v285 = vld [vmem:[%s250 + $0x100] sm:$0xff]
        %v286 = vld [vmem:[%s250 + $0x108] sm:$0xff]
        %v287 = vld [vmem:[%s250 + $0x110] sm:$0xff]
        %v288 = vld [vmem:[%s250 + $0x118] sm:$0xff]
        %v289 = vld [vmem:[%s250 + $0x120] sm:$0xff]
        %v290 = vld [vmem:[%s250 + $0x128] sm:$0xff]
        %v291 = vld [vmem:[%s250 + $0x130] sm:$0xff]
        %v292 = vld [vmem:[%s250 + $0x138] sm:$0xff]
        %v293 = vld [vmem:[%s250 + $0x140] sm:$0xff]
        %v294 = vld [vmem:[%s250 + $0x148] sm:$0xff]
        %v295 = vld [vmem:[%s250 + $0x150] sm:$0xff]
        %v296 = vld [vmem:[%s250 + $0x158] sm:$0xff]
        %v297 = vld [vmem:[%s250 + $0x160] sm:$0xff]
        %v298 = vld [vmem:[%s250 + $0x168] sm:$0xff]
        %v299 = vld [vmem:[%s250 + $0x170] sm:$0xff]
        %v300 = vld [vmem:[%s250 + $0x178] sm:$0xff]
        %v301 = vld [vmem:[%s250 + $0x180] sm:$0xff]
        %v302 = vld [vmem:[%s250 + $0x188] sm:$0xff]
        %v303 = vld [vmem:[%s250 + $0x190] sm:$0xff]
        %v304 = vld [vmem:[%s250 + $0x198] sm:$0xff]
        %v305 = vld [vmem:[%s250 + $0x1a0] sm:$0xff]
        %v306 = vld [vmem:[%s250 + $0x1a8] sm:$0xff]
        %v307 = vld [vmem:[%s250 + $0x1b0] sm:$0xff]
        %v308 = vld [vmem:[%s250 + $0x1b8] sm:$0xff]
        %v309 = vld [vmem:[%s250 + $0x1c0] sm:$0xff]
        %v310 = vld [vmem:[%s250 + $0x1c8] sm:$0xff]
        %v311 = vld [vmem:[%s250 + $0x1d0] sm:$0xff]
        %v312 = vld [vmem:[%s250 + $0x1d8] sm:$0xff]
        %v313 = vld [vmem:[%s250 + $0x1e0] sm:$0xff]
        %v314 = vld [vmem:[%s250 + $0x1e8] sm:$0xff]
        %v315 = vld [vmem:[%s250 + $0x1f0] sm:$0xff]
        %v316 = vld [vmem:[%s250 + $0x1f8] sm:$0xff]
        %v317 = vld [vmem:[%s5] sm:$0xff]
        %v318 = vld [vmem:[%s5 + $0x8] sm:$0xff]
        %v319 = vld [vmem:[%s5 + $0x10] sm:$0xff]
        %v320 = vld [vmem:[%s5 + $0x18] sm:$0xff]
        %v321 = vld [vmem:[%s5 + $0x20] sm:$0xff]
        %v322 = vld [vmem:[%s5 + $0x28] sm:$0xff]
        %v323 = vld [vmem:[%s5 + $0x30] sm:$0xff]
        %v324 = vld [vmem:[%s5 + $0x38] sm:$0xff]
        %v325 = vld [vmem:[%s5 + $0x40] sm:$0xff]
        %v326 = vld [vmem:[%s5 + $0x48] sm:$0xff]
        %v327 = vld [vmem:[%s5 + $0x50] sm:$0xff]
        %v328 = vld [vmem:[%s5 + $0x58] sm:$0xff]
        %v329 = vld [vmem:[%s5 + $0x60] sm:$0xf]
        %v330 = vld [vmem:[%s5 + $0x68] sm:$0xff]
        %v331 = vld [vmem:[%s5 + $0x70] sm:$0xff]
        %v332 = vld [vmem:[%s5 + $0x78] sm:$0xff]
        %v333 = vld [vmem:[%s5 + $0x80] sm:$0xff]
        %v334 = vld [vmem:[%s5 + $0x88] sm:$0xff]
        %v335 = vld [vmem:[%s5 + $0x90] sm:$0xff]
        %v336 = vld [vmem:[%s5 + $0x98] sm:$0x3]
        %v337 = vld [vmem:[%s5 + $0xa0] sm:$0x1]
        %v338 = vld [vmem:[%s1] sm:$0xff]
        %v339 = vld [vmem:[%s1 + $0x8] sm:$0xff]
        %v340 = vld [vmem:[%s1 + $0x10] sm:$0xff]
        %v341 = vld [vmem:[%s1 + $0x18] sm:$0xff]
        %v342 = vld [vmem:[%s1 + $0x20] sm:$0xff]
        %v343 = vld [vmem:[%s1 + $0x28] sm:$0xff]
        %v344 = vld [vmem:[%s1 + $0x30] sm:$0xff]
        %v345 = vld [vmem:[%s1 + $0x38] sm:$0xff]
        %v346 = vld [vmem:[%s1 + $0x40] sm:$0xff]
        %v347 = vld [vmem:[%s1 + $0x48] sm:$0xff]
        %v348 = vld [vmem:[%s1 + $0x50] sm:$0xff]
        %v349 = vld [vmem:[%s1 + $0x58] sm:$0xff]
        %v350 = vld [vmem:[%s1 + $0x60] sm:$0xf]
        %352 = vset.pattern.permute.xlu0 0
        %353 = vperm.xlu0 %352, %v317
        %v354 = vpop.permute.xlu0 %353
        %357 = vset.pattern.permute.xlu0 0
        %358 = vperm.xlu0 %357, %v318
        %v359 = vpop.permute.xlu0 %358
        %362 = vset.pattern.permute.xlu0 0
        %363 = vperm.xlu0 %362, %v319
        %v364 = vpop.permute.xlu0 %363
        %367 = vset.pattern.permute.xlu0 0
        %368 = vperm.xlu0 %367, %v320
        %v369 = vpop.permute.xlu0 %368
        %372 = vset.pattern.permute.xlu0 0
        %373 = vperm.xlu0 %372, %v321
        %v374 = vpop.permute.xlu0 %373
        %377 = vset.pattern.permute.xlu0 0
        %378 = vperm.xlu0 %377, %v322
        %v379 = vpop.permute.xlu0 %378
        %382 = vset.pattern.permute.xlu0 0
        %383 = vperm.xlu0 %382, %v323
        %v384 = vpop.permute.xlu0 %383
        %387 = vset.pattern.permute.xlu0 0
        %388 = vperm.xlu0 %387, %v324
        %v389 = vpop.permute.xlu0 %388
        %392 = vset.pattern.permute.xlu0 0
        %393 = vperm.xlu0 %392, %v325
        %v394 = vpop.permute.xlu0 %393
        %397 = vset.pattern.permute.xlu0 0
        %398 = vperm.xlu0 %397, %v326
        %v399 = vpop.permute.xlu0 %398
        %402 = vset.pattern.permute.xlu0 0
        %403 = vperm.xlu0 %402, %v327
        %v404 = vpop.permute.xlu0 %403
        %407 = vset.pattern.permute.xlu0 0
        %408 = vperm.xlu0 %407, %v328
        %v409 = vpop.permute.xlu0 %408
        %412 = vset.pattern.permute.xlu0 0
        %413 = vperm.xlu0 %412, %v329
        %v414 = vpop.permute.xlu0 %413
        %vm416 = vcmask 261120
        %v418 = vsel %vm416, %v338, 0
        %v421 = vsel %vm416, %v339, 0
        %v424 = vsel %vm416, %v340, 0
        %v427 = vsel %vm416, %v341, 0
        %v430 = vsel %vm416, %v342, 0
        %v433 = vsel %vm416, %v343, 0
        %v436 = vsel %vm416, %v344, 0
        %v439 = vsel %vm416, %v345, 0
        %v442 = vsel %vm416, %v346, 0
        %v445 = vsel %vm416, %v347, 0
        %v448 = vsel %vm416, %v348, 0
        %v451 = vsel %vm416, %v349, 0
        %v454 = vsel %vm416, %v350, 0
        %v457 = vsel %vm416, %v253, 0
        %v460 = vsel %vm416, %v254, 0
        %v463 = vsel %vm416, %v255, 0
        %v466 = vsel %vm416, %v256, 0
        %v469 = vsel %vm416, %v257, 0
        %v472 = vsel %vm416, %v258, 0
        %v475 = vsel %vm416, %v259, 0
        %v478 = vsel %vm416, %v260, 0
        %v481 = vsel %vm416, %v261, 0
        %v484 = vsel %vm416, %v262, 0
        %v487 = vsel %vm416, %v263, 0
        %v490 = vsel %vm416, %v264, 0
        %v493 = vsel %vm416, %v265, 0
        %v496 = vsel %vm416, %v266, 0
        %v499 = vsel %vm416, %v267, 0
        %v502 = vsel %vm416, %v268, 0
        %v505 = vsel %vm416, %v269, 0
        %v508 = vsel %vm416, %v270, 0
        %v511 = vsel %vm416, %v271, 0
        %v514 = vsel %vm416, %v272, 0
        %v517 = vsel %vm416, %v273, 0
        %v520 = vsel %vm416, %v274, 0
        %v523 = vsel %vm416, %v275, 0
        %v526 = vsel %vm416, %v276, 0
        %v529 = vsel %vm416, %v277, 0
        %v532 = vsel %vm416, %v278, 0
        %v535 = vsel %vm416, %v279, 0
        %v538 = vsel %vm416, %v280, 0
        %v541 = vsel %vm416, %v281, 0
        %v544 = vsel %vm416, %v282, 0
        %v547 = vsel %vm416, %v283, 0
        %v550 = vsel %vm416, %v284, 0
        %v553 = vsel %vm416, %v285, 0
        %v556 = vsel %vm416, %v286, 0
        %v559 = vsel %vm416, %v287, 0
        %v562 = vsel %vm416, %v288, 0
        %v565 = vsel %vm416, %v289, 0
        %v568 = vsel %vm416, %v290, 0
        %v571 = vsel %vm416, %v291, 0
        %v574 = vsel %vm416, %v292, 0
        %v577 = vsel %vm416, %v293, 0
        %v580 = vsel %vm416, %v294, 0
        %v583 = vsel %vm416, %v295, 0
        %v586 = vsel %vm416, %v296, 0
        %v589 = vsel %vm416, %v297, 0
        %v592 = vsel %vm416, %v298, 0
        %v595 = vsel %vm416, %v299, 0
        %v598 = vsel %vm416, %v300, 0
        %v601 = vsel %vm416, %v301, 0
        %v604 = vsel %vm416, %v302, 0
        %v607 = vsel %vm416, %v303, 0
        %v610 = vsel %vm416, %v304, 0
        %v613 = vsel %vm416, %v305, 0
        %v616 = vsel %vm416, %v306, 0
        %v619 = vsel %vm416, %v307, 0
        %v622 = vsel %vm416, %v308, 0
        %v625 = vsel %vm416, %v309, 0
        %v628 = vsel %vm416, %v310, 0
        %v631 = vsel %vm416, %v311, 0
        %v634 = vsel %vm416, %v312, 0
        %v637 = vsel %vm416, %v313, 0
        %v640 = vsel %vm416, %v314, 0
        %v643 = vsel %vm416, %v315, 0
        %v646 = vsel %vm416, %v316, 0
        %648 = vmatprep.subr.mxu0 0.0
        %649 = vmatpush1.xpose.msra.mxu0 %v457
        %650 = vmatprep.subr.mxu0 0.0
        %651 = vmatpush1.xpose.msra.mxu0 %v460
        %652 = vmatprep.subr.mxu0 0.0
        %653 = vmatpush1.xpose.msra.mxu0 %v463
        %654 = vmatprep.subr.mxu0 0.0
        %655 = vmatpush1.xpose.msra.mxu0 %v466
        %656 = vmatprep.subr.mxu0 0.0
        %657 = vmatpush1.xpose.msra.mxu0 %v469
        %658 = vmatprep.subr.mxu0 0.0
        %659 = vmatpush1.xpose.msra.mxu0 %v472
        %660 = vmatprep.subr.mxu0 0.0
        %661 = vmatpush1.xpose.msra.mxu0 %v475
        %662 = vmatprep.subr.mxu0 0.0
        %663 = vmatpush1.xpose.msra.mxu0 %v478
        %664 = vmatprep.subr.mxu0 0.0
        %665 = vmatpush1.xpose.msra.mxu0 %v481
        %666 = vmatprep.subr.mxu0 0.0
        %667 = vmatpush1.xpose.msra.mxu0 %v484
        %668 = vmatprep.subr.mxu0 0.0
        %669 = vmatpush1.xpose.msra.mxu0 %v487
        %670 = vmatprep.subr.mxu0 0.0
        %671 = vmatpush1.xpose.msra.mxu0 %v490
        %672 = vmatprep.subr.mxu0 0.0
        %673 = vmatpush1.xpose.msra.mxu0 %v493
        %674 = vmatprep.subr.mxu0 0.0
        %675 = vmatpush1.xpose.msra.mxu0 %v496
        %676 = vmatprep.subr.mxu0 0.0
        %677 = vmatpush1.xpose.msra.mxu0 %v499
        %678 = vmatprep.subr.mxu0 0.0
        %679 = vmatpush1.xpose.msra.mxu0 %v502
        %680 = vmatprep.subr.mxu0 0.0
        %681 = vmatpush1.xpose.msra.mxu0 %v505
        %682 = vmatprep.subr.mxu0 0.0
        %683 = vmatpush1.xpose.msra.mxu0 %v508
        %684 = vmatprep.subr.mxu0 0.0
        %685 = vmatpush1.xpose.msra.mxu0 %v511
        %686 = vmatprep.subr.mxu0 0.0
        %687 = vmatpush1.xpose.msra.mxu0 %v514
        %688 = vmatprep.subr.mxu0 0.0
        %689 = vmatpush1.xpose.msra.mxu0 %v517
        %690 = vmatprep.subr.mxu0 0.0
        %691 = vmatpush1.xpose.msra.mxu0 %v520
        %692 = vmatprep.subr.mxu0 0.0
        %693 = vmatpush1.xpose.msra.mxu0 %v523
        %694 = vmatprep.subr.mxu0 0.0
        %695 = vmatpush1.xpose.msra.mxu0 %v526
        %696 = vmatprep.subr.mxu0 0.0
        %697 = vmatpush1.xpose.msra.mxu0 %v529
        %698 = vmatprep.subr.mxu0 0.0
        %699 = vmatpush1.xpose.msra.mxu0 %v532
        %700 = vmatprep.subr.mxu0 0.0
        %701 = vmatpush1.xpose.msra.mxu0 %v535
        %702 = vmatprep.subr.mxu0 0.0
        %703 = vmatpush1.xpose.msra.mxu0 %v538
        %704 = vmatprep.subr.mxu0 0.0
        %705 = vmatpush1.xpose.msra.mxu0 %v541
        %706 = vmatprep.subr.mxu0 0.0
        %707 = vmatpush1.xpose.msra.mxu0 %v544
        %708 = vmatprep.subr.mxu0 0.0
        %709 = vmatpush1.xpose.msra.mxu0 %v547
        %710 = vmatprep.subr.mxu0 0.0
        %711 = vmatpush1.xpose.msra.mxu0 %v550
        %712 = vmatprep.mubr.f32.mxu0 0.0
        %713 = vmatmul.mubr.f32.gmra.mrb[0].mxu0 %v418
        %v714 = vpop.f32.mrb[0].mxu0
        %v715 = vadd.f32 %v354, %v714
        %v716 = vpop.f32.mrb[0].mxu0
        %v717 = vadd.f32 %v354, %v716
        %718 = vmatprep.mubr.f32.mxu0 0.0
        %719 = vmatmul.mubr.f32.gmra.mrb[0].mxu0 %v421
        %v720 = vpop.f32.mrb[0].mxu0
        %v721 = vadd.f32 %v359, %v720
        %v722 = vpop.f32.mrb[0].mxu0
        %v723 = vadd.f32 %v359, %v722
        %724 = vmatprep.mubr.f32.mxu0 0.0
        %725 = vmatmul.mubr.f32.gmra.mrb[0].mxu0 %v424
        %v726 = vpop.f32.mrb[0].mxu0
        %v727 = vadd.f32 %v364, %v726
        %v728 = vpop.f32.mrb[0].mxu0
        %v729 = vadd.f32 %v364, %v728
        %730 = vmatprep.mubr.f32.mxu0 0.0
        %731 = vmatmul.mubr.f32.gmra.mrb[0].mxu0 %v427
        %v732 = vpop.f32.mrb[0].mxu0
        %v733 = vadd.f32 %v369, %v732
        %v734 = vpop.f32.mrb[0].mxu0
        %v735 = vadd.f32 %v369, %v734
        %736 = vmatprep.mubr.f32.mxu0 0.0
        %737 = vmatmul.mubr.f32.gmra.mrb[0].mxu0 %v430
        %v738 = vpop.f32.mrb[0].mxu0
        %v739 = vadd.f32 %v374, %v738
        %v740 = vpop.f32.mrb[0].mxu0
        %v741 = vadd.f32 %v374, %v740
        %742 = vmatprep.mubr.f32.mxu0 0.0
        %743 = vmatmul.mubr.f32.gmra.mrb[0].mxu0 %v433
        %v744 = vpop.f32.mrb[0].mxu0
        %v745 = vadd.f32 %v379, %v744
        %v746 = vpop.f32.mrb[0].mxu0
        %v747 = vadd.f32 %v379, %v746
        %748 = vmatprep.mubr.f32.mxu0 0.0
        %749 = vmatmul.mubr.f32.gmra.mrb[0].mxu0 %v436
        %v750 = vpop.f32.mrb[0].mxu0
        %v751 = vadd.f32 %v384, %v750
        %v752 = vpop.f32.mrb[0].mxu0
        %v753 = vadd.f32 %v384, %v752
        %754 = vmatprep.mubr.f32.mxu0 0.0
        %755 = vmatmul.mubr.f32.gmra.mrb[0].mxu0 %v439
        %v756 = vpop.f32.mrb[0].mxu0
        %v757 = vadd.f32 %v389, %v756
        %v758 = vpop.f32.mrb[0].mxu0
        %v759 = vadd.f32 %v389, %v758
        %760 = vmatprep.mubr.f32.mxu0 0.0
        %761 = vmatmul.mubr.f32.gmra.mrb[0].mxu0 %v442
        %v762 = vpop.f32.mrb[0].mxu0
        %v763 = vadd.f32 %v394, %v762
        %v764 = vpop.f32.mrb[0].mxu0
        %v765 = vadd.f32 %v394, %v764
        %766 = vmatprep.mubr.f32.mxu0 0.0
        %767 = vmatmul.mubr.f32.gmra.mrb[0].mxu0 %v445
        %v768 = vpop.f32.mrb[0].mxu0
        %v769 = vadd.f32 %v399, %v768
        %v770 = vpop.f32.mrb[0].mxu0
        %v771 = vadd.f32 %v399, %v770
        %772 = vmatprep.mubr.f32.mxu0 0.0
        %773 = vmatmul.mubr.f32.gmra.mrb[0].mxu0 %v448
        %v774 = vpop.f32.mrb[0].mxu0
        %v775 = vadd.f32 %v404, %v774
        %v776 = vpop.f32.mrb[0].mxu0
        %v777 = vadd.f32 %v404, %v776
        %778 = vmatprep.mubr.f32.mxu0 0.0
        %779 = vmatmul.mubr.f32.gmra.mrb[0].mxu0 %v451
        %v780 = vpop.f32.mrb[0].mxu0
        %v781 = vadd.f32 %v409, %v780
        %v782 = vpop.f32.mrb[0].mxu0
        %v783 = vadd.f32 %v409, %v782
        %784 = vmatprep.mubr.f32.mxu0 0.0
        %785 = vmatmul.mubr.f32.gmra.mrb[0].mxu0 %v454
        %v786 = vpop.f32.mrb[0].mxu0
        %v787 = vadd.f32 %v414, %v786
        %v788 = vpop.f32.mrb[0].mxu0
        %v789 = vadd.f32 %v414, %v788
        %790 = vdwg.mxu0
        %791 = vmatprep.subr.mxu0 0.0
        %792 = vmatpush1.xpose.msra.mxu0 %v553
        %793 = vmatprep.subr.mxu0 0.0
        %794 = vmatpush1.xpose.msra.mxu0 %v556
        %795 = vmatprep.subr.mxu0 0.0
        %796 = vmatpush1.xpose.msra.mxu0 %v559
        %797 = vmatprep.subr.mxu0 0.0
        %798 = vmatpush1.xpose.msra.mxu0 %v562
        %799 = vmatprep.subr.mxu0 0.0
        %800 = vmatpush1.xpose.msra.mxu0 %v565
        %801 = vmatprep.subr.mxu0 0.0
        %802 = vmatpush1.xpose.msra.mxu0 %v568
        %803 = vmatprep.subr.mxu0 0.0
        %804 = vmatpush1.xpose.msra.mxu0 %v571
        %805 = vmatprep.subr.mxu0 0.0
        %806 = vmatpush1.xpose.msra.mxu0 %v574
        %807 = vmatprep.subr.mxu0 0.0
        %808 = vmatpush1.xpose.msra.mxu0 %v577
        %809 = vmatprep.subr.mxu0 0.0
        %810 = vmatpush1.xpose.msra.mxu0 %v580
        %811 = vmatprep.subr.mxu0 0.0
        %812 = vmatpush1.xpose.msra.mxu0 %v583
        %813 = vmatprep.subr.mxu0 0.0
        %814 = vmatpush1.xpose.msra.mxu0 %v586
        %815 = vmatprep.subr.mxu0 0.0
        %816 = vmatpush1.xpose.msra.mxu0 %v589
        %817 = vmatprep.subr.mxu0 0.0
        %818 = vmatpush1.xpose.msra.mxu0 %v592
        %819 = vmatprep.subr.mxu0 0.0
        %820 = vmatpush1.xpose.msra.mxu0 %v595
        %821 = vmatprep.subr.mxu0 0.0
        %822 = vmatpush1.xpose.msra.mxu0 %v598
        %823 = vmatprep.subr.mxu0 0.0
        %824 = vmatpush1.xpose.msra.mxu0 %v601
        %825 = vmatprep.subr.mxu0 0.0
        %826 = vmatpush1.xpose.msra.mxu0 %v604
        %827 = vmatprep.subr.mxu0 0.0
        %828 = vmatpush1.xpose.msra.mxu0 %v607
        %829 = vmatprep.subr.mxu0 0.0
        %830 = vmatpush1.xpose.msra.mxu0 %v610
        %831 = vmatprep.subr.mxu0 0.0
        %832 = vmatpush1.xpose.msra.mxu0 %v613
        %833 = vmatprep.subr.mxu0 0.0
        %834 = vmatpush1.xpose.msra.mxu0 %v616
        %835 = vmatprep.subr.mxu0 0.0
        %836 = vmatpush1.xpose.msra.mxu0 %v619
        %837 = vmatprep.subr.mxu0 0.0
        %838 = vmatpush1.xpose.msra.mxu0 %v622
        %839 = vmatprep.subr.mxu0 0.0
        %840 = vmatpush1.xpose.msra.mxu0 %v625
        %841 = vmatprep.subr.mxu0 0.0
        %842 = vmatpush1.xpose.msra.mxu0 %v628
        %843 = vmatprep.subr.mxu0 0.0
        %844 = vmatpush1.xpose.msra.mxu0 %v631
        %845 = vmatprep.subr.mxu0 0.0
        %846 = vmatpush1.xpose.msra.mxu0 %v634
        %847 = vmatprep.subr.mxu0 0.0
        %848 = vmatpush1.xpose.msra.mxu0 %v637
        %849 = vmatprep.subr.mxu0 0.0
        %850 = vmatpush1.xpose.msra.mxu0 %v640
        %851 = vmatprep.subr.mxu0 0.0
        %852 = vmatpush1.xpose.msra.mxu0 %v643
        %853 = vmatprep.subr.mxu0 0.0
        %854 = vmatpush1.xpose.msra.mxu0 %v646
        %855 = vmatprep.mubr.f32.mxu0 0.0
        %856 = vmatmul.mubr.f32.gmra.mrb[0].mxu0 %v418
        %v857 = vpop.f32.mrb[0].mxu0
        %v858 = vadd.f32 %v354, %v857
        %v859 = vpop.f32.mrb[0].mxu0
        %v860 = vadd.f32 %v354, %v859
        %861 = vmatprep.mubr.f32.mxu0 0.0
        %862 = vmatmul.mubr.f32.gmra.mrb[0].mxu0 %v421
        %v863 = vpop.f32.mrb[0].mxu0
        %v864 = vadd.f32 %v359, %v863
        %v865 = vpop.f32.mrb[0].mxu0
        %v866 = vadd.f32 %v359, %v865
        %867 = vmatprep.mubr.f32.mxu0 0.0
        %868 = vmatmul.mubr.f32.gmra.mrb[0].mxu0 %v424
        %v869 = vpop.f32.mrb[0].mxu0
        %v870 = vadd.f32 %v364, %v869
        %v871 = vpop.f32.mrb[0].mxu0
        %v872 = vadd.f32 %v364, %v871
        %873 = vmatprep.mubr.f32.mxu0 0.0
        %874 = vmatmul.mubr.f32.gmra.mrb[0].mxu0 %v427
        %v875 = vpop.f32.mrb[0].mxu0
        %v876 = vadd.f32 %v369, %v875
        %v877 = vpop.f32.mrb[0].mxu0
        %v878 = vadd.f32 %v369, %v877
        %879 = vmatprep.mubr.f32.mxu0 0.0
        %880 = vmatmul.mubr.f32.gmra.mrb[0].mxu0 %v430
        %v881 = vpop.f32.mrb[0].mxu0
        %v882 = vadd.f32 %v374, %v881
        %v883 = vpop.f32.mrb[0].mxu0
        %v884 = vadd.f32 %v374, %v883
        %885 = vmatprep.mubr.f32.mxu0 0.0
        %886 = vmatmul.mubr.f32.gmra.mrb[0].mxu0 %v433
        %v887 = vpop.f32.mrb[0].mxu0
        %v888 = vadd.f32 %v379, %v887
        %v889 = vpop.f32.mrb[0].mxu0
        %v890 = vadd.f32 %v379, %v889
        %891 = vmatprep.mubr.f32.mxu0 0.0
        %892 = vmatmul.mubr.f32.gmra.mrb[0].mxu0 %v436
        %v893 = vpop.f32.mrb[0].mxu0
        %v894 = vadd.f32 %v384, %v893
        %v895 = vpop.f32.mrb[0].mxu0
        %v896 = vadd.f32 %v384, %v895
        %897 = vmatprep.mubr.f32.mxu0 0.0
        %898 = vmatmul.mubr.f32.gmra.mrb[0].mxu0 %v439
        %v899 = vpop.f32.mrb[0].mxu0
        %v900 = vadd.f32 %v389, %v899
        %v901 = vpop.f32.mrb[0].mxu0
        %v902 = vadd.f32 %v389, %v901
        %903 = vmatprep.mubr.f32.mxu0 0.0
        %904 = vmatmul.mubr.f32.gmra.mrb[0].mxu0 %v442
        %v905 = vpop.f32.mrb[0].mxu0
        %v906 = vadd.f32 %v394, %v905
        %v907 = vpop.f32.mrb[0].mxu0
        %v908 = vadd.f32 %v394, %v907
        %909 = vmatprep.mubr.f32.mxu0 0.0
        %910 = vmatmul.mubr.f32.gmra.mrb[0].mxu0 %v445
        %v911 = vpop.f32.mrb[0].mxu0
        %v912 = vadd.f32 %v399, %v911
        %v913 = vpop.f32.mrb[0].mxu0
        %v914 = vadd.f32 %v399, %v913
        %915 = vmatprep.mubr.f32.mxu0 0.0
        %916 = vmatmul.mubr.f32.gmra.mrb[0].mxu0 %v448
        %v917 = vpop.f32.mrb[0].mxu0
        %v918 = vadd.f32 %v404, %v917
        %v919 = vpop.f32.mrb[0].mxu0
        %v920 = vadd.f32 %v404, %v919
        %921 = vmatprep.mubr.f32.mxu0 0.0
        %922 = vmatmul.mubr.f32.gmra.mrb[0].mxu0 %v451
        %v923 = vpop.f32.mrb[0].mxu0
        %v924 = vadd.f32 %v409, %v923
        %v925 = vpop.f32.mrb[0].mxu0
        %v926 = vadd.f32 %v409, %v925
        %927 = vmatprep.mubr.f32.mxu0 0.0
        %928 = vmatmul.mubr.f32.gmra.mrb[0].mxu0 %v454
        %v929 = vpop.f32.mrb[0].mxu0
        %v930 = vadd.f32 %v414, %v929
        %v931 = vpop.f32.mrb[0].mxu0
        %v932 = vadd.f32 %v414, %v931
        %933 = vdwg.mxu0
        %v934 = vmax.f32 %v715, 0.0
        %v935 = vmax.f32 %v717, 0.0
        %v936 = vmax.f32 %v858, 0.0
        %v937 = vmax.f32 %v860, 0.0
        %v938 = vmax.f32 %v721, 0.0
        %v939 = vmax.f32 %v723, 0.0
        %v940 = vmax.f32 %v864, 0.0
        %v941 = vmax.f32 %v866, 0.0
        %v942 = vmax.f32 %v727, 0.0
        %v943 = vmax.f32 %v729, 0.0
        %v944 = vmax.f32 %v870, 0.0
        %v945 = vmax.f32 %v872, 0.0
        %v946 = vmax.f32 %v733, 0.0
        %v947 = vmax.f32 %v735, 0.0
        %v948 = vmax.f32 %v876, 0.0
        %v949 = vmax.f32 %v878, 0.0
        %v950 = vmax.f32 %v739, 0.0
        %v951 = vmax.f32 %v741, 0.0
        %v952 = vmax.f32 %v882, 0.0
        %v953 = vmax.f32 %v884, 0.0
        %v954 = vmax.f32 %v745, 0.0
        %v955 = vmax.f32 %v747, 0.0
        %v956 = vmax.f32 %v888, 0.0
        %v957 = vmax.f32 %v890, 0.0
        %v958 = vmax.f32 %v751, 0.0
        %v959 = vmax.f32 %v753, 0.0
        %v960 = vmax.f32 %v894, 0.0
        %v961 = vmax.f32 %v896, 0.0
        %v962 = vmax.f32 %v757, 0.0
        %v963 = vmax.f32 %v759, 0.0
        %v964 = vmax.f32 %v900, 0.0
        %v965 = vmax.f32 %v902, 0.0
        %v966 = vmax.f32 %v763, 0.0
        %v967 = vmax.f32 %v765, 0.0
        %v968 = vmax.f32 %v906, 0.0
        %v969 = vmax.f32 %v908, 0.0
        %v970 = vmax.f32 %v769, 0.0
        %v971 = vmax.f32 %v771, 0.0
        %v972 = vmax.f32 %v912, 0.0
        %v973 = vmax.f32 %v914, 0.0
        %v974 = vmax.f32 %v775, 0.0
        %v975 = vmax.f32 %v777, 0.0
        %v976 = vmax.f32 %v918, 0.0
        %v977 = vmax.f32 %v920, 0.0
        %v978 = vmax.f32 %v781, 0.0
        %v979 = vmax.f32 %v783, 0.0
        %v980 = vmax.f32 %v924, 0.0
        %v981 = vmax.f32 %v926, 0.0
        %v982 = vmax.f32 %v787, 0.0
        %v983 = vmax.f32 %v789, 0.0
        %v984 = vmax.f32 %v930, 0.0
        %v985 = vmax.f32 %v932, 0.0
        %v986 = vld [vmem:[%s2] sm:$0xff]
        %v987 = vld [vmem:[%s2 + $0x8] sm:$0xff]
        %v988 = vld [vmem:[%s2 + $0x10] sm:$0xff]
        %v989 = vld [vmem:[%s2 + $0x18] sm:$0xff]
        %v990 = vld [vmem:[%s2 + $0x20] sm:$0xff]
        %992 = vset.pattern.permute.xlu0 0
        %993 = vperm.xlu0 %992, %v330
        %v994 = vpop.permute.xlu0 %993
        %997 = vset.pattern.permute.xlu0 0
        %998 = vperm.xlu0 %997, %v331
        %v999 = vpop.permute.xlu0 %998
        %1002 = vset.pattern.permute.xlu0 0
        %1003 = vperm.xlu0 %1002, %v332
        %v1004 = vpop.permute.xlu0 %1003
        %1007 = vset.pattern.permute.xlu0 0
        %1008 = vperm.xlu0 %1007, %v333
        %v1009 = vpop.permute.xlu0 %1008
        %1012 = vset.pattern.permute.xlu0 0
        %1013 = vperm.xlu0 %1012, %v334
        %v1014 = vpop.permute.xlu0 %1013
        %vm1016 = vcmask 818176
        %v1018 = vsel %vm1016, %v986, 0
        %v1021 = vsel %vm1016, %v987, 0
        %v1024 = vsel %vm1016, %v988, 0
        %v1027 = vsel %vm1016, %v989, 0
        %v1030 = vsel %vm1016, %v990, 0
        %vm1032 = vcmask 1043456
        %v1034 = vsel %vm1032, %v982, 0
        %v1037 = vsel %vm1032, %v983, 0
        %v1040 = vsel %vm1032, %v984, 0
        %v1043 = vsel %vm1032, %v985, 0
        %1045 = vmatprep.subr.mxu0 %v935
        %1046 = vmatpush1.msra.mxu0 %v934
        %1047 = vmatprep.subr.mxu0 %v939
        %1048 = vmatpush1.msra.mxu0 %v938
        %1049 = vmatprep.subr.mxu0 %v943
        %1050 = vmatpush1.msra.mxu0 %v942
        %1051 = vmatprep.subr.mxu0 %v947
        %1052 = vmatpush1.msra.mxu0 %v946
        %1053 = vmatprep.subr.mxu0 %v951
        %1054 = vmatpush1.msra.mxu0 %v950
        %1055 = vmatprep.subr.mxu0 %v955
        %1056 = vmatpush1.msra.mxu0 %v954
        %1057 = vmatprep.subr.mxu0 %v959
        %1058 = vmatpush1.msra.mxu0 %v958
        %1059 = vmatprep.subr.mxu0 %v963
        %1060 = vmatpush1.msra.mxu0 %v962
        %1061 = vmatprep.subr.mxu0 %v967
        %1062 = vmatpush1.msra.mxu0 %v966
        %1063 = vmatprep.subr.mxu0 %v971
        %1064 = vmatpush1.msra.mxu0 %v970
        %1065 = vmatprep.subr.mxu0 %v975
        %1066 = vmatpush1.msra.mxu0 %v974
        %1067 = vmatprep.subr.mxu0 %v979
        %1068 = vmatpush1.msra.mxu0 %v978
        %1069 = vmatprep.subr.mxu0 %v1037
        %1070 = vmatpush1.msra.mxu0 %v1034
        %1071 = vmatprep.subr.mxu0 0.0
        %1072 = vmatpush1.msra.mxu0 0.0
        %1073 = vmatprep.subr.mxu0 0.0
        %1074 = vmatpush1.msra.mxu0 0.0
        %1075 = vmatprep.subr.mxu0 0.0
        %1076 = vmatpush1.msra.mxu0 0.0
        %1077 = vmatprep.subr.mxu0 0.0
        %1078 = vmatpush1.msra.mxu0 0.0
        %1079 = vmatprep.subr.mxu0 0.0
        %1080 = vmatpush1.msra.mxu0 0.0
        %1081 = vmatprep.subr.mxu0 0.0
        %1082 = vmatpush1.msra.mxu0 0.0
        %1083 = vmatprep.subr.mxu0 0.0
        %1084 = vmatpush1.msra.mxu0 0.0
        %1085 = vmatprep.subr.mxu0 0.0
        %1086 = vmatpush1.msra.mxu0 0.0
        %1087 = vmatprep.subr.mxu0 0.0
        %1088 = vmatpush1.msra.mxu0 0.0
        %1089 = vmatprep.subr.mxu0 0.0
        %1090 = vmatpush1.msra.mxu0 0.0
        %1091 = vmatprep.subr.mxu0 0.0
        %1092 = vmatpush1.msra.mxu0 0.0
        %1093 = vmatprep.subr.mxu0 0.0
        %1094 = vmatpush1.msra.mxu0 0.0
        %1095 = vmatprep.subr.mxu0 0.0
        %1096 = vmatpush1.msra.mxu0 0.0
        %1097 = vmatprep.subr.mxu0 0.0
        %1098 = vmatpush1.msra.mxu0 0.0
        %1099 = vmatprep.subr.mxu0 0.0
        %1100 = vmatpush1.msra.mxu0 0.0
        %1101 = vmatprep.subr.mxu0 0.0
        %1102 = vmatpush1.msra.mxu0 0.0
        %1103 = vmatprep.subr.mxu0 0.0
        %1104 = vmatpush1.msra.mxu0 0.0
        %1105 = vmatprep.subr.mxu0 0.0
        %1106 = vmatpush1.msra.mxu0 0.0
        %1107 = vmatprep.subr.mxu0 0.0
        %1108 = vmatpush1.msra.mxu0 0.0
        %1109 = vmatprep.mubr.f32.mxu0 0.0
        %1110 = vmatmul.mubr.f32.gmra.mrb[0].mxu0 %v1018
        %v1111 = vpop.f32.mrb[0].mxu0
        %v1112 = vadd.f32 %v994, %v1111
        %v1113 = vpop.f32.mrb[0].mxu0
        %v1114 = vadd.f32 %v994, %v1113
        %1115 = vmatprep.mubr.f32.mxu0 0.0
        %1116 = vmatmul.mubr.f32.gmra.mrb[0].mxu0 %v1021
        %v1117 = vpop.f32.mrb[0].mxu0
        %v1118 = vadd.f32 %v999, %v1117
        %v1119 = vpop.f32.mrb[0].mxu0
        %v1120 = vadd.f32 %v999, %v1119
        %1121 = vmatprep.mubr.f32.mxu0 0.0
        %1122 = vmatmul.mubr.f32.gmra.mrb[0].mxu0 %v1024
        %v1123 = vpop.f32.mrb[0].mxu0
        %v1124 = vadd.f32 %v1004, %v1123
        %v1125 = vpop.f32.mrb[0].mxu0
        %v1126 = vadd.f32 %v1004, %v1125
        %1127 = vmatprep.mubr.f32.mxu0 0.0
        %1128 = vmatmul.mubr.f32.gmra.mrb[0].mxu0 %v1027
        %v1129 = vpop.f32.mrb[0].mxu0
        %v1130 = vadd.f32 %v1009, %v1129
        %v1131 = vpop.f32.mrb[0].mxu0
        %v1132 = vadd.f32 %v1009, %v1131
        %1133 = vmatprep.mubr.f32.mxu0 0.0
        %1134 = vmatmul.mubr.f32.gmra.mrb[0].mxu0 %v1030
        %v1135 = vpop.f32.mrb[0].mxu0
        %v1136 = vadd.f32 %v1014, %v1135
        %v1137 = vpop.f32.mrb[0].mxu0
        %v1138 = vadd.f32 %v1014, %v1137
        %1139 = vdwg.mxu0
        %1140 = vmatprep.subr.mxu0 %v937
        %1141 = vmatpush1.msra.mxu0 %v936
        %1142 = vmatprep.subr.mxu0 %v941
        %1143 = vmatpush1.msra.mxu0 %v940
        %1144 = vmatprep.subr.mxu0 %v945
        %1145 = vmatpush1.msra.mxu0 %v944
        %1146 = vmatprep.subr.mxu0 %v949
        %1147 = vmatpush1.msra.mxu0 %v948
        %1148 = vmatprep.subr.mxu0 %v953
        %1149 = vmatpush1.msra.mxu0 %v952
        %1150 = vmatprep.subr.mxu0 %v957
        %1151 = vmatpush1.msra.mxu0 %v956
        %1152 = vmatprep.subr.mxu0 %v961
        %1153 = vmatpush1.msra.mxu0 %v960
        %1154 = vmatprep.subr.mxu0 %v965
        %1155 = vmatpush1.msra.mxu0 %v964
        %1156 = vmatprep.subr.mxu0 %v969
        %1157 = vmatpush1.msra.mxu0 %v968
        %1158 = vmatprep.subr.mxu0 %v973
        %1159 = vmatpush1.msra.mxu0 %v972
        %1160 = vmatprep.subr.mxu0 %v977
        %1161 = vmatpush1.msra.mxu0 %v976
        %1162 = vmatprep.subr.mxu0 %v981
        %1163 = vmatpush1.msra.mxu0 %v980
        %1164 = vmatprep.subr.mxu0 %v1043
        %1165 = vmatpush1.msra.mxu0 %v1040
        %1166 = vmatprep.subr.mxu0 0.0
        %1167 = vmatpush1.msra.mxu0 0.0
        %1168 = vmatprep.subr.mxu0 0.0
        %1169 = vmatpush1.msra.mxu0 0.0
        %1170 = vmatprep.subr.mxu0 0.0
        %1171 = vmatpush1.msra.mxu0 0.0
        %1172 = vmatprep.subr.mxu0 0.0
        %1173 = vmatpush1.msra.mxu0 0.0
        %1174 = vmatprep.subr.mxu0 0.0
        %1175 = vmatpush1.msra.mxu0 0.0
        %1176 = vmatprep.subr.mxu0 0.0
        %1177 = vmatpush1.msra.mxu0 0.0
        %1178 = vmatprep.subr.mxu0 0.0
        %1179 = vmatpush1.msra.mxu0 0.0
        %1180 = vmatprep.subr.mxu0 0.0
        %1181 = vmatpush1.msra.mxu0 0.0
        %1182 = vmatprep.subr.mxu0 0.0
        %1183 = vmatpush1.msra.mxu0 0.0
        %1184 = vmatprep.subr.mxu0 0.0
        %1185 = vmatpush1.msra.mxu0 0.0
        %1186 = vmatprep.subr.mxu0 0.0
        %1187 = vmatpush1.msra.mxu0 0.0
        %1188 = vmatprep.subr.mxu0 0.0
        %1189 = vmatpush1.msra.mxu0 0.0
        %1190 = vmatprep.subr.mxu0 0.0
        %1191 = vmatpush1.msra.mxu0 0.0
        %1192 = vmatprep.subr.mxu0 0.0
        %1193 = vmatpush1.msra.mxu0 0.0
        %1194 = vmatprep.subr.mxu0 0.0
        %1195 = vmatpush1.msra.mxu0 0.0
        %1196 = vmatprep.subr.mxu0 0.0
        %1197 = vmatpush1.msra.mxu0 0.0
        %1198 = vmatprep.subr.mxu0 0.0
        %1199 = vmatpush1.msra.mxu0 0.0
        %1200 = vmatprep.subr.mxu0 0.0
        %1201 = vmatpush1.msra.mxu0 0.0
        %1202 = vmatprep.subr.mxu0 0.0
        %1203 = vmatpush1.msra.mxu0 0.0
        %1204 = vmatprep.mubr.f32.mxu0 0.0
        %1205 = vmatmul.mubr.f32.gmra.mrb[0].mxu0 %v1018
        %v1206 = vpop.f32.mrb[0].mxu0
        %v1207 = vadd.f32 %v994, %v1206
        %v1208 = vpop.f32.mrb[0].mxu0
        %v1209 = vadd.f32 %v994, %v1208
        %1210 = vmatprep.mubr.f32.mxu0 0.0
        %1211 = vmatmul.mubr.f32.gmra.mrb[0].mxu0 %v1021
        %v1212 = vpop.f32.mrb[0].mxu0
        %v1213 = vadd.f32 %v999, %v1212
        %v1214 = vpop.f32.mrb[0].mxu0
        %v1215 = vadd.f32 %v999, %v1214
        %1216 = vmatprep.mubr.f32.mxu0 0.0
        %1217 = vmatmul.mubr.f32.gmra.mrb[0].mxu0 %v1024
        %v1218 = vpop.f32.mrb[0].mxu0
        %v1219 = vadd.f32 %v1004, %v1218
        %v1220 = vpop.f32.mrb[0].mxu0
        %v1221 = vadd.f32 %v1004, %v1220
        %1222 = vmatprep.mubr.f32.mxu0 0.0
        %1223 = vmatmul.mubr.f32.gmra.mrb[0].mxu0 %v1027
        %v1224 = vpop.f32.mrb[0].mxu0
        %v1225 = vadd.f32 %v1009, %v1224
        %v1226 = vpop.f32.mrb[0].mxu0
        %v1227 = vadd.f32 %v1009, %v1226
        %1228 = vmatprep.mubr.f32.mxu0 0.0
        %1229 = vmatmul.mubr.f32.gmra.mrb[0].mxu0 %v1030
        %v1230 = vpop.f32.mrb[0].mxu0
        %v1231 = vadd.f32 %v1014, %v1230
        %v1232 = vpop.f32.mrb[0].mxu0
        %v1233 = vadd.f32 %v1014, %v1232
        %1234 = vdwg.mxu0
        %v1235 = vmax.f32 %v1112, 0.0
        %v1236 = vmax.f32 %v1114, 0.0
        %v1237 = vmax.f32 %v1207, 0.0
        %v1238 = vmax.f32 %v1209, 0.0
        %v1239 = vmax.f32 %v1118, 0.0
        %v1240 = vmax.f32 %v1120, 0.0
        %v1241 = vmax.f32 %v1213, 0.0
        %v1242 = vmax.f32 %v1215, 0.0
        %v1243 = vmax.f32 %v1124, 0.0
        %v1244 = vmax.f32 %v1126, 0.0
        %v1245 = vmax.f32 %v1219, 0.0
        %v1246 = vmax.f32 %v1221, 0.0
        %v1247 = vmax.f32 %v1130, 0.0
        %v1248 = vmax.f32 %v1132, 0.0
        %v1249 = vmax.f32 %v1225, 0.0
        %v1250 = vmax.f32 %v1227, 0.0
        %v1251 = vmax.f32 %v1136, 0.0
        %v1252 = vmax.f32 %v1138, 0.0
        %v1253 = vmax.f32 %v1231, 0.0
        %v1254 = vmax.f32 %v1233, 0.0
        %v1255 = vld [vmem:[%s3] sm:$0xff]
        %v1256 = vld [vmem:[%s3 + $0x8] sm:$0x3]
        %1258 = vset.pattern.permute.xlu0 0
        %1259 = vperm.xlu0 %1258, %v335
        %v1260 = vpop.permute.xlu0 %1259
        %1263 = vset.pattern.permute.xlu0 0
        %1264 = vperm.xlu0 %1263, %v336
        %v1265 = vpop.permute.xlu0 %1264
        %vm1267 = vcmask 326656
        %v1269 = vsel %vm1267, %v1255, 0
        %v1272 = vsel %vm1267, %v1256, 0
        %1274 = vmatprep.subr.mxu0 %v1236
        %1275 = vmatpush1.msra.mxu0 %v1235
        %1276 = vmatprep.subr.mxu0 %v1240
        %1277 = vmatpush1.msra.mxu0 %v1239
        %1278 = vmatprep.subr.mxu0 %v1244
        %1279 = vmatpush1.msra.mxu0 %v1243
        %1280 = vmatprep.subr.mxu0 %v1248
        %1281 = vmatpush1.msra.mxu0 %v1247
        %1282 = vmatprep.subr.mxu0 %v1252
        %1283 = vmatpush1.msra.mxu0 %v1251
        %1284 = vmatprep.subr.mxu0 0.0
        %1285 = vmatpush1.msra.mxu0 0.0
        %1286 = vmatprep.subr.mxu0 0.0
        %1287 = vmatpush1.msra.mxu0 0.0
        %1288 = vmatprep.subr.mxu0 0.0
        %1289 = vmatpush1.msra.mxu0 0.0
        %1290 = vmatprep.subr.mxu0 0.0
        %1291 = vmatpush1.msra.mxu0 0.0
        %1292 = vmatprep.subr.mxu0 0.0
        %1293 = vmatpush1.msra.mxu0 0.0
        %1294 = vmatprep.subr.mxu0 0.0
        %1295 = vmatpush1.msra.mxu0 0.0
        %1296 = vmatprep.subr.mxu0 0.0
        %1297 = vmatpush1.msra.mxu0 0.0
        %1298 = vmatprep.subr.mxu0 0.0
        %1299 = vmatpush1.msra.mxu0 0.0
        %1300 = vmatprep.subr.mxu0 0.0
        %1301 = vmatpush1.msra.mxu0 0.0
        %1302 = vmatprep.subr.mxu0 0.0
        %1303 = vmatpush1.msra.mxu0 0.0
        %1304 = vmatprep.subr.mxu0 0.0
        %1305 = vmatpush1.msra.mxu0 0.0
        %1306 = vmatprep.subr.mxu0 0.0
        %1307 = vmatpush1.msra.mxu0 0.0
        %1308 = vmatprep.subr.mxu0 0.0
        %1309 = vmatpush1.msra.mxu0 0.0
        %1310 = vmatprep.subr.mxu0 0.0
        %1311 = vmatpush1.msra.mxu0 0.0
        %1312 = vmatprep.subr.mxu0 0.0
        %1313 = vmatpush1.msra.mxu0 0.0
        %1314 = vmatprep.subr.mxu0 0.0
        %1315 = vmatpush1.msra.mxu0 0.0
        %1316 = vmatprep.subr.mxu0 0.0
        %1317 = vmatpush1.msra.mxu0 0.0
        %1318 = vmatprep.subr.mxu0 0.0
        %1319 = vmatpush1.msra.mxu0 0.0
        %1320 = vmatprep.subr.mxu0 0.0
        %1321 = vmatpush1.msra.mxu0 0.0
        %1322 = vmatprep.subr.mxu0 0.0
        %1323 = vmatpush1.msra.mxu0 0.0
        %1324 = vmatprep.subr.mxu0 0.0
        %1325 = vmatpush1.msra.mxu0 0.0
        %1326 = vmatprep.subr.mxu0 0.0
        %1327 = vmatpush1.msra.mxu0 0.0
        %1328 = vmatprep.subr.mxu0 0.0
        %1329 = vmatpush1.msra.mxu0 0.0
        %1330 = vmatprep.subr.mxu0 0.0
        %1331 = vmatpush1.msra.mxu0 0.0
        %1332 = vmatprep.subr.mxu0 0.0
        %1333 = vmatpush1.msra.mxu0 0.0
        %1334 = vmatprep.subr.mxu0 0.0
        %1335 = vmatpush1.msra.mxu0 0.0
        %1336 = vmatprep.subr.mxu0 0.0
        %1337 = vmatpush1.msra.mxu0 0.0
        %1338 = vmatprep.mubr.f32.mxu0 0.0
        %1339 = vmatmul.mubr.f32.gmra.mrb[0].mxu0 %v1269
        %v1340 = vpop.f32.mrb[0].mxu0
        %v1341 = vadd.f32 %v1260, %v1340
        %v1342 = vpop.f32.mrb[0].mxu0
        %v1343 = vadd.f32 %v1260, %v1342
        %1344 = vmatprep.mubr.f32.mxu0 0.0
        %1345 = vmatmul.mubr.f32.gmra.mrb[0].mxu0 %v1272
        %v1346 = vpop.f32.mrb[0].mxu0
        %v1347 = vadd.f32 %v1265, %v1346
        %v1348 = vpop.f32.mrb[0].mxu0
        %v1349 = vadd.f32 %v1265, %v1348
        %1350 = vdwg.mxu0
        %1351 = vmatprep.subr.mxu0 %v1238
        %1352 = vmatpush1.msra.mxu0 %v1237
        %1353 = vmatprep.subr.mxu0 %v1242
        %1354 = vmatpush1.msra.mxu0 %v1241
        %1355 = vmatprep.subr.mxu0 %v1246
        %1356 = vmatpush1.msra.mxu0 %v1245
        %1357 = vmatprep.subr.mxu0 %v1250
        %1358 = vmatpush1.msra.mxu0 %v1249
        %1359 = vmatprep.subr.mxu0 %v1254
        %1360 = vmatpush1.msra.mxu0 %v1253
        %1361 = vmatprep.subr.mxu0 0.0
        %1362 = vmatpush1.msra.mxu0 0.0
        %1363 = vmatprep.subr.mxu0 0.0
        %1364 = vmatpush1.msra.mxu0 0.0
        %1365 = vmatprep.subr.mxu0 0.0
        %1366 = vmatpush1.msra.mxu0 0.0
        %1367 = vmatprep.subr.mxu0 0.0
        %1368 = vmatpush1.msra.mxu0 0.0
        %1369 = vmatprep.subr.mxu0 0.0
        %1370 = vmatpush1.msra.mxu0 0.0
        %1371 = vmatprep.subr.mxu0 0.0
        %1372 = vmatpush1.msra.mxu0 0.0
        %1373 = vmatprep.subr.mxu0 0.0
        %1374 = vmatpush1.msra.mxu0 0.0
        %1375 = vmatprep.subr.mxu0 0.0
        %1376 = vmatpush1.msra.mxu0 0.0
        %1377 = vmatprep.subr.mxu0 0.0
        %1378 = vmatpush1.msra.mxu0 0.0
        %1379 = vmatprep.subr.mxu0 0.0
        %1380 = vmatpush1.msra.mxu0 0.0
        %1381 = vmatprep.subr.mxu0 0.0
        %1382 = vmatpush1.msra.mxu0 0.0
        %1383 = vmatprep.subr.mxu0 0.0
        %1384 = vmatpush1.msra.mxu0 0.0
        %1385 = vmatprep.subr.mxu0 0.0
        %1386 = vmatpush1.msra.mxu0 0.0
        %1387 = vmatprep.subr.mxu0 0.0
        %1388 = vmatpush1.msra.mxu0 0.0
        %1389 = vmatprep.subr.mxu0 0.0
        %1390 = vmatpush1.msra.mxu0 0.0
        %1391 = vmatprep.subr.mxu0 0.0
        %1392 = vmatpush1.msra.mxu0 0.0
        %1393 = vmatprep.subr.mxu0 0.0
        %1394 = vmatpush1.msra.mxu0 0.0
        %1395 = vmatprep.subr.mxu0 0.0
        %1396 = vmatpush1.msra.mxu0 0.0
        %1397 = vmatprep.subr.mxu0 0.0
        %1398 = vmatpush1.msra.mxu0 0.0
        %1399 = vmatprep.subr.mxu0 0.0
        %1400 = vmatpush1.msra.mxu0 0.0
        %1401 = vmatprep.subr.mxu0 0.0
        %1402 = vmatpush1.msra.mxu0 0.0
        %1403 = vmatprep.subr.mxu0 0.0
        %1404 = vmatpush1.msra.mxu0 0.0
        %1405 = vmatprep.subr.mxu0 0.0
        %1406 = vmatpush1.msra.mxu0 0.0
        %1407 = vmatprep.subr.mxu0 0.0
        %1408 = vmatpush1.msra.mxu0 0.0
        %1409 = vmatprep.subr.mxu0 0.0
        %1410 = vmatpush1.msra.mxu0 0.0
        %1411 = vmatprep.subr.mxu0 0.0
        %1412 = vmatpush1.msra.mxu0 0.0
        %1413 = vmatprep.subr.mxu0 0.0
        %1414 = vmatpush1.msra.mxu0 0.0
        %1415 = vmatprep.mubr.f32.mxu0 0.0
        %1416 = vmatmul.mubr.f32.gmra.mrb[0].mxu0 %v1269
        %v1417 = vpop.f32.mrb[0].mxu0
        %v1418 = vadd.f32 %v1260, %v1417
        %v1419 = vpop.f32.mrb[0].mxu0
        %v1420 = vadd.f32 %v1260, %v1419
        %1421 = vmatprep.mubr.f32.mxu0 0.0
        %1422 = vmatmul.mubr.f32.gmra.mrb[0].mxu0 %v1272
        %v1423 = vpop.f32.mrb[0].mxu0
        %v1424 = vadd.f32 %v1265, %v1423
        %v1425 = vpop.f32.mrb[0].mxu0
        %v1426 = vadd.f32 %v1265, %v1425
        %1427 = vdwg.mxu0
        %v1428 = vmax.f32 %v1341, 0.0
        %v1429 = vmax.f32 %v1343, 0.0
        %v1430 = vmax.f32 %v1418, 0.0
        %v1431 = vmax.f32 %v1420, 0.0
        %v1432 = vmax.f32 %v1347, 0.0
        %v1433 = vmax.f32 %v1349, 0.0
        %v1434 = vmax.f32 %v1424, 0.0
        %v1435 = vmax.f32 %v1426, 0.0
        %v1436 = vld [vmem:[%s4] sm:$0x1]
        %1438 = vset.pattern.permute.xlu0 0
        %1439 = vperm.xlu0 %1438, %v337
        %v1440 = vpop.permute.xlu0 %1439
        %vm1442 = vcmask 80896
        %v1444 = vsel %vm1442, %v1436, 0
        %vm1446 = vcmask 1041408
        %v1448 = vsel %vm1446, %v1432, 0
        %v1451 = vsel %vm1446, %v1433, 0
        %v1454 = vsel %vm1446, %v1434, 0
        %v1457 = vsel %vm1446, %v1435, 0
        %1459 = vmatprep.subr.mxu0 %v1429
        %1460 = vmatpush1.msra.mxu0 %v1428
        %1461 = vmatprep.subr.mxu0 %v1451
        %1462 = vmatpush1.msra.mxu0 %v1448
        %1463 = vmatprep.subr.mxu0 0.0
        %1464 = vmatpush1.msra.mxu0 0.0
        %1465 = vmatprep.subr.mxu0 0.0
        %1466 = vmatpush1.msra.mxu0 0.0
        %1467 = vmatprep.subr.mxu0 0.0
        %1468 = vmatpush1.msra.mxu0 0.0
        %1469 = vmatprep.subr.mxu0 0.0
        %1470 = vmatpush1.msra.mxu0 0.0
        %1471 = vmatprep.subr.mxu0 0.0
        %1472 = vmatpush1.msra.mxu0 0.0
        %1473 = vmatprep.subr.mxu0 0.0
        %1474 = vmatpush1.msra.mxu0 0.0
        %1475 = vmatprep.subr.mxu0 0.0
        %1476 = vmatpush1.msra.mxu0 0.0
        %1477 = vmatprep.subr.mxu0 0.0
        %1478 = vmatpush1.msra.mxu0 0.0
        %1479 = vmatprep.subr.mxu0 0.0
        %1480 = vmatpush1.msra.mxu0 0.0
        %1481 = vmatprep.subr.mxu0 0.0
        %1482 = vmatpush1.msra.mxu0 0.0
        %1483 = vmatprep.subr.mxu0 0.0
        %1484 = vmatpush1.msra.mxu0 0.0
        %1485 = vmatprep.subr.mxu0 0.0
        %1486 = vmatpush1.msra.mxu0 0.0
        %1487 = vmatprep.subr.mxu0 0.0
        %1488 = vmatpush1.msra.mxu0 0.0
        %1489 = vmatprep.subr.mxu0 0.0
        %1490 = vmatpush1.msra.mxu0 0.0
        %1491 = vmatprep.subr.mxu0 0.0
        %1492 = vmatpush1.msra.mxu0 0.0
        %1493 = vmatprep.subr.mxu0 0.0
        %1494 = vmatpush1.msra.mxu0 0.0
        %1495 = vmatprep.subr.mxu0 0.0
        %1496 = vmatpush1.msra.mxu0 0.0
        %1497 = vmatprep.subr.mxu0 0.0
        %1498 = vmatpush1.msra.mxu0 0.0
        %1499 = vmatprep.subr.mxu0 0.0
        %1500 = vmatpush1.msra.mxu0 0.0
        %1501 = vmatprep.subr.mxu0 0.0
        %1502 = vmatpush1.msra.mxu0 0.0
        %1503 = vmatprep.subr.mxu0 0.0
        %1504 = vmatpush1.msra.mxu0 0.0
        %1505 = vmatprep.subr.mxu0 0.0
        %1506 = vmatpush1.msra.mxu0 0.0
        %1507 = vmatprep.subr.mxu0 0.0
        %1508 = vmatpush1.msra.mxu0 0.0
        %1509 = vmatprep.subr.mxu0 0.0
        %1510 = vmatpush1.msra.mxu0 0.0
        %1511 = vmatprep.subr.mxu0 0.0
        %1512 = vmatpush1.msra.mxu0 0.0
        %1513 = vmatprep.subr.mxu0 0.0
        %1514 = vmatpush1.msra.mxu0 0.0
        %1515 = vmatprep.subr.mxu0 0.0
        %1516 = vmatpush1.msra.mxu0 0.0
        %1517 = vmatprep.subr.mxu0 0.0
        %1518 = vmatpush1.msra.mxu0 0.0
        %1519 = vmatprep.subr.mxu0 0.0
        %1520 = vmatpush1.msra.mxu0 0.0
        %1521 = vmatprep.subr.mxu0 0.0
        %1522 = vmatpush1.msra.mxu0 0.0
        %1523 = vmatprep.mubr.f32.mxu0 0.0
        %1524 = vmatmul.mubr.f32.gmra.mrb[0].mxu0 %v1444
        %v1525 = vpop.f32.mrb[0].mxu0
        %v1526 = vadd.f32 %v1440, %v1525
        %v1527 = vpop.f32.mrb[0].mxu0
        %v1528 = vadd.f32 %v1440, %v1527
        %1529 = vdwg.mxu0
        %1530 = vmatprep.subr.mxu0 %v1431
        %1531 = vmatpush1.msra.mxu0 %v1430
        %1532 = vmatprep.subr.mxu0 %v1457
        %1533 = vmatpush1.msra.mxu0 %v1454
        %1534 = vmatprep.subr.mxu0 0.0
        %1535 = vmatpush1.msra.mxu0 0.0
        %1536 = vmatprep.subr.mxu0 0.0
        %1537 = vmatpush1.msra.mxu0 0.0
        %1538 = vmatprep.subr.mxu0 0.0
        %1539 = vmatpush1.msra.mxu0 0.0
        %1540 = vmatprep.subr.mxu0 0.0
        %1541 = vmatpush1.msra.mxu0 0.0
        %1542 = vmatprep.subr.mxu0 0.0
        %1543 = vmatpush1.msra.mxu0 0.0
        %1544 = vmatprep.subr.mxu0 0.0
        %1545 = vmatpush1.msra.mxu0 0.0
        %1546 = vmatprep.subr.mxu0 0.0
        %1547 = vmatpush1.msra.mxu0 0.0
        %1548 = vmatprep.subr.mxu0 0.0
        %1549 = vmatpush1.msra.mxu0 0.0
        %1550 = vmatprep.subr.mxu0 0.0
        %1551 = vmatpush1.msra.mxu0 0.0
        %1552 = vmatprep.subr.mxu0 0.0
        %1553 = vmatpush1.msra.mxu0 0.0
        %1554 = vmatprep.subr.mxu0 0.0
        %1555 = vmatpush1.msra.mxu0 0.0
        %1556 = vmatprep.subr.mxu0 0.0
        %1557 = vmatpush1.msra.mxu0 0.0
        %1558 = vmatprep.subr.mxu0 0.0
        %1559 = vmatpush1.msra.mxu0 0.0
        %1560 = vmatprep.subr.mxu0 0.0
        %1561 = vmatpush1.msra.mxu0 0.0
        %1562 = vmatprep.subr.mxu0 0.0
        %1563 = vmatpush1.msra.mxu0 0.0
        %1564 = vmatprep.subr.mxu0 0.0
        %1565 = vmatpush1.msra.mxu0 0.0
        %1566 = vmatprep.subr.mxu0 0.0
        %1567 = vmatpush1.msra.mxu0 0.0
        %1568 = vmatprep.subr.mxu0 0.0
        %1569 = vmatpush1.msra.mxu0 0.0
        %1570 = vmatprep.subr.mxu0 0.0
        %1571 = vmatpush1.msra.mxu0 0.0
        %1572 = vmatprep.subr.mxu0 0.0
        %1573 = vmatpush1.msra.mxu0 0.0
        %1574 = vmatprep.subr.mxu0 0.0
        %1575 = vmatpush1.msra.mxu0 0.0
        %1576 = vmatprep.subr.mxu0 0.0
        %1577 = vmatpush1.msra.mxu0 0.0
        %1578 = vmatprep.subr.mxu0 0.0
        %1579 = vmatpush1.msra.mxu0 0.0
        %1580 = vmatprep.subr.mxu0 0.0
        %1581 = vmatpush1.msra.mxu0 0.0
        %1582 = vmatprep.subr.mxu0 0.0
        %1583 = vmatpush1.msra.mxu0 0.0
        %1584 = vmatprep.subr.mxu0 0.0
        %1585 = vmatpush1.msra.mxu0 0.0
        %1586 = vmatprep.subr.mxu0 0.0
        %1587 = vmatpush1.msra.mxu0 0.0
        %1588 = vmatprep.subr.mxu0 0.0
        %1589 = vmatpush1.msra.mxu0 0.0
        %1590 = vmatprep.subr.mxu0 0.0
        %1591 = vmatpush1.msra.mxu0 0.0
        %1592 = vmatprep.subr.mxu0 0.0
        %1593 = vmatpush1.msra.mxu0 0.0
        %1594 = vmatprep.mubr.f32.mxu0 0.0
        %1595 = vmatmul.mubr.f32.gmra.mrb[0].mxu0 %v1444
        %v1596 = vpop.f32.mrb[0].mxu0
        %v1597 = vadd.f32 %v1440, %v1596
        %v1598 = vpop.f32.mrb[0].mxu0
        %v1599 = vadd.f32 %v1440, %v1598
        %1600 = vdwg.mxu0
        %v1605 = vcombine.low %v1526, %v1528
        %v1606 = vcombine.low %v1597, %v1599
        %v1608 = vunpack.c.l.s4 1966171168
        %v1609 = vunpack.c.0.s8 %v1608
        %v1610 = vlaneseq
        %v1611 = vshrl.u32 %v1610, 7
        %v1612 = vsub.s32 %v1609, %v1611
        %v1613 = vrot.slane %v1605, %v1612
        %v1615 = vunpack.c.l.s4 1966171168
        %v1616 = vunpack.c.0.s8 %v1615
        %v1617 = vlaneseq
        %v1618 = vshrl.u32 %v1617, 7
        %v1619 = vsub.s32 %v1616, %v1618
        %v1620 = vrot.slane %v1606, %v1619
        %v1621 = vcombine.low %v1613, %v1620
        %v1623 = vunpack.c.l.s4 1966171168
        %v1624 = vunpack.c.0.s8 %v1623
        %v1625 = vlaneseq
        %v1626 = vshrl.u32 %v1625, 7
        %v1627 = vsub.s32 %v1624, %v1626
        %v1628 = vrot.slane %v1621, %v1627
        %v1630 = vlaneseq
        %vm1631 = vcmp.ge.s32.totalorder %v1630, 0
        %vm1632 = vcmp.lt.s32.totalorder %v1630, 512
        %vm1633 = vmand %vm1631, %vm1632
        %1634 = vst.msk [vmem:[%s245] sm:$0xf] %vm1633, %v1628
        %s1635 = sand.u32 %s159, 1
        %s1636 = scalar_lea.sflag [#allocation3], %s1635
        %s1637 = sand.u32 %s159, 1
        %s1638 = smul.addr %s1637, 4
        %s1639 = scalar_lea.vmem [#allocation2], %s1638
        // Predicated region
        $region45: #{tpu_custom_call.1} parent=43 // pred_check
          %p1640 = pneg %p169
        $region46: #{tpu_custom_call.1} parent=43 // pred_check_branch
          %1642 = sbr.rel (%p1640) target = $region48
        $region47: #{tpu_custom_call.1} parent=43 // pred_region
          %s1643 = smul.u32 4, %s20
          %s1645 = ssub.s32 64, 64
          %1646 = vsyncadd %s1636, %s1645
          %s1647 = smul.addr %s1643, 16
          %s1648 = scalar_lea.hbm %s6, %s1647
          %s1650 = sshll.u32 %s1639, 4
          %s1651 = int_to_ptr.vmem [resolvable:$true] %s1650
          %1653 = dma.vmem_to_hbm [thread:$0]  %s1651, 64, %s1648, %s1636
        $region48: #{tpu_custom_call.1} parent=43 // pred_fallthru
          _
      $region44: #{tpu_custom_call.1} parent=5 // pred_fallthru
        _
      %p1654 = scmp.le.s32.totalorder 2, %s15
      // Predicated region
      $region49: #{tpu_custom_call.1} parent=5 // pred_check
        %p1655 = pneg %p1654
      $region50: #{tpu_custom_call.1} parent=5 // pred_check_branch
        %1657 = sbr.rel (%p1655) target = $region52
      $region51: #{tpu_custom_call.1} parent=5 // pred_region
        %s1658 = ssub.s32 %s15, 2
        // Predicated region
        $region53: #{tpu_custom_call.1} parent=51 // pred_check
          %p1659 = pneg %p175
        $region54: #{tpu_custom_call.1} parent=51 // pred_check_branch
          %1661 = sbr.rel (%p1659) target = $region56
        $region55: #{tpu_custom_call.1} parent=51 // pred_region
          %s1662 = sand.u32 %s160, 1
          %s1663 = scalar_lea.sflag [#allocation3], %s1662
          %s1664 = sand.u32 %s160, 1
          %s1665 = smul.addr %s1664, 4
          %s1666 = scalar_lea.vmem [#allocation2], %s1665
          %1667 = dma.done %s1663, 64
        $region56: #{tpu_custom_call.1} parent=51 // pred_fallthru
          _
      $region52: #{tpu_custom_call.1} parent=5 // pred_fallthru
        _
    $region6: #{tpu_custom_call.1} parent=1 // loop_footer
      %s19 = sadd.s32 1, %s15
    $region7: #{tpu_custom_call.1} parent=1 // loop_footer_branch
      %14 = sbr.rel target = $region3
    $region8: #{tpu_custom_call.1} parent=1 // loop_exit
      _
    %1668 = vsyncpa [#allocation3], 1
    %s1669 = scalar_lea.sflag [#allocation3], 1
    %1670 = vsyncpa %s1669, 1

</llo_original>
